<compile_context>
chip_gen: v7x
topology: tpu7x:2x2x1
jax: 0.10.0
libtpu: 0.0.40
codegen_flags: <defaults>
</compile_context>

<pallas_src>
import jax
import jax.numpy as jnp
from jax import lax
from jax.experimental import pallas as pl
from jax.experimental.pallas import tpu as pltpu

COMPUTE_DTYPE = jnp.bfloat16   # MXU operand dtype; accumulation stays float32.

# conv hyper-parameters fixed by the PyTorch module
_K1, _S1 = 4, 2   # ConvBlock(Cin -> 32, kernel_size=4, stride=2)
_K2, _S2 = 3, 2   # ConvBlock(32  -> 32, kernel_size=3, stride=2)


def _round_up(v, m):
    return ((v + m - 1) // m) * m


# ----------------------------------------------------------------------------
# Single fused Pallas kernel: conv1 + ReLU + conv2 + ReLU + fused linear heads
# ----------------------------------------------------------------------------
def _encoder_fused_kernel(p1x_ref, w1bd_ref, b1_ref, w2_ref, b2_ref,
                          wh_ref, bh_ref, out_ref, flat_ref):
    """One grid step == one batch block of NB samples.

    p1x_ref : [n_pos*NB, T2*K1len]  rows ordered (conv2 position s, sample n),
                                    columns ordered (conv2 tap g, conv1 patch).
    w1bd_ref: [T2*K1len, T2*C1]     block-diagonal conv1 weight (9 copies).
    w2_ref  : [T2*C1, C2]           flattened conv2 weight.
    wh_ref  : [n_pos*C2, 2*latent]  fused mean/logvar head (flatten-permuted).
    out_ref : [NB, 2*latent]
    flat_ref: VMEM scratch [NB, n_pos*C2] float32 (per-sample feature rows).
    """
    f32 = jnp.float32
    cd = w1bd_ref.dtype

    nb = out_ref.shape[0]
    rows = p1x_ref.shape[0]
    n_pos = rows // nb
    c2 = w2_ref.shape[1]

    # conv1 for all 9 conv2 taps at once (block-diagonal weight) + bias + ReLU
    h = jnp.dot(p1x_ref[...], w1bd_ref[...], preferred_element_type=f32)
    h = jnp.maximum(h + b1_ref[...], 0.0).astype(cd)          # [rows, T2*C1]

    # conv2 as one matmul over the flattened (tap, c1) contraction + bias + ReLU
    a2 = jnp.dot(h, w2_ref[...], preferred_element_type=f32)
    a2 = jnp.maximum(a2 + b2_ref[...], 0.0)                   # [rows, C2] f32

    # NCHW-flatten relayout: rows are (s, n) ordered, so each conv2 position s
    # is a tile-aligned (NB, C2) slice scattered to lane offset s*C2 of the
    # per-sample feature row.  36 small static stores; no transposes/reshapes.
    for s in range(n_pos):
        flat_ref[:, s * c2:(s + 1) * c2] = a2[s * nb:(s + 1) * nb, :]

    # fused mean/logvar heads: one K = n_pos*C2 (=1152) matmul.
    feats = flat_ref[...].astype(cd)
    out = jnp.dot(feats, wh_ref[...], preferred_element_type=f32) + bh_ref[...]
    out_ref[...] = out.astype(out_ref.dtype)


# ----------------------------------------------------------------------------
# Parameter init (PyTorch layout) and one-time repack into kernel layout
# ----------------------------------------------------------------------------
def init_encoder_params(key, x_dim=(1, 28, 28), latent_dim=16):
    cin, h, w = x_dim
    c1, c2 = 32, 32
    oh1 = (h - _K1) // _S1 + 1
    ow1 = (w - _K1) // _S1 + 1
    oh2 = (oh1 - _K2) // _S2 + 1
    ow2 = (ow1 - _K2) // _S2 + 1
    conv_out = c2 * oh2 * ow2            # == conv_outputshape in the PyTorch module

    keys = jax.random.split(key, 8)
    scale = 0.05
    params = {
        "conv1_w": scale * jax.random.normal(keys[0], (c1, cin, _K1, _K1), jnp.float32),
        "conv1_b": scale * jax.random.normal(keys[1], (c1,), jnp.float32),
        "conv2_w": scale * jax.random.normal(keys[2], (c2, c1, _K2, _K2), jnp.float32),
        "conv2_b": scale * jax.random.normal(keys[3], (c2,), jnp.float32),
        # PyTorch Linear weight layout: [latent_dim, conv_out]
        "zmean_w": scale * jax.random.normal(keys[4], (latent_dim, conv_out), jnp.float32),
        "zmean_b": scale * jax.random.normal(keys[5], (latent_dim,), jnp.float32),
        "zlogvar_w": scale * jax.random.normal(keys[6], (latent_dim, conv_out), jnp.float32),
        "zlogvar_b": scale * jax.random.normal(keys[7], (latent_dim,), jnp.float32),
    }
    return params, conv_out


def pack_params(params, compute_dtype=COMPUTE_DTYPE):
    """One-time conversion of PyTorch-layout params into the kernel layout.

    All weight transposes / block-diagonal packing / head permutation and
    head fusion are hoisted here so the forward pass issues no runtime weight
    reshuffling.
    """
    c1, cin, kh1, kw1 = params["conv1_w"].shape
    c2, c1_, kh2, kw2 = params["conv2_w"].shape
    latent, conv_out = params["zmean_w"].shape
    n_pos = conv_out // c2
    t2 = kh2 * kw2
    k1len = kh1 * kw1 * cin

    # conv1 as a matmul matrix (columns in (ki, kj, cin) im2col order),
    # replicated block-diagonally so all 9 conv2 taps use ONE matmul.
    w1 = jnp.transpose(params["conv1_w"], (2, 3, 1, 0)).reshape(k1len, c1)
    w1bd = jnp.kron(jnp.eye(t2, dtype=w1.dtype), w1)               # [t2*k1len, t2*c1]
    b1t = jnp.tile(params["conv1_b"], (t2,)).reshape(1, t2 * c1)

    # conv2 as one matmul over the flattened (tap, c1) contraction axis
    w2 = jnp.transpose(params["conv2_w"], (2, 3, 1, 0)).reshape(t2 * c1, c2)
    b2 = params["conv2_b"].reshape(1, c2)

    # fused mean/logvar head over the kernel's (position, channel) flatten
    # order; permutation from PyTorch's NCHW (channel, position) order is
    # folded in here (one-time).
    def head(wt):
        return jnp.transpose(wt.reshape(latent, c2, n_pos),
                             (2, 1, 0)).reshape(n_pos * c2, latent)
    wh = jnp.concatenate([head(params["zmean_w"]), head(params["zlogvar_w"])], axis=1)
    bh = jnp.concatenate([params["zmean_b"], params["zlogvar_b"]]).reshape(1, 2 * latent)

    return {
        "w1bd": w1bd.astype(compute_dtype),
        "b1": b1t.astype(jnp.float32),
        "w2": w2.astype(compute_dtype),
        "b2": b2.astype(jnp.float32),
        "wh": wh.astype(compute_dtype),
        "bh": bh.astype(jnp.float32),
    }


# ----------------------------------------------------------------------------
# Forward pass
# ----------------------------------------------------------------------------
def encoder_forward(kparams, x):
    """x: [N, C, H, W] (PyTorch convention) -> (mean [N, L], logvar [N, L])."""
    n, cin, h, w = x.shape
    t2 = _K2 * _K2
    k1len = _K1 * _K1 * cin
    c1 = kparams["w1bd"].shape[1] // t2
    c2 = kparams["w2"].shape[1]
    lat2 = kparams["wh"].shape[1]            # 2 * latent_dim (fused heads)
    latent = lat2 // 2

    oh1 = (h - _K1) // _S1 + 1
    ow1 = (w - _K1) // _S1 + 1
    oh2 = (oh1 - _K2) // _S2 + 1
    ow2 = (ow1 - _K2) // _S2 + 1
    n_pos = oh2 * ow2
    assert kparams["w1bd"].shape[0] == t2 * k1len
    assert kparams["wh"].shape[0] == n_pos * c2

    # Batch block = one grid step (sublane-aligned); "parallel" lets v7x split
    # blocks across its two TensorCores and gives DMA/compute overlap elsewhere.
    nb = min(_round_up(n, 8), 64)
    n_pad = _round_up(n, nb)
    n_blocks = n_pad // nb
    if n_pad != n:
        x = jnp.concatenate(
            [x, jnp.zeros((n_pad - n,) + x.shape[1:], x.dtype)], axis=0)

    # --- conv1 im2col, regrouped per conv2 tap, as ONE lane-dense slab -------
    # rows ordered (batch block, conv2 position s, sample within block);
    # columns ordered (conv2 tap g, conv1 patch (ki, kj, cin)).
    # (pure relayout of a tiny input; stays in XLA where it fuses.)
    x_nhwc = jnp.transpose(x, (0, 2, 3, 1))                         # [Np, H, W, C]
    cols = []
    for ki in range(_K1):
        for kj in range(_K1):
            cols.append(x_nhwc[:, ki:ki + _S1 * oh1:_S1,
                               kj:kj + _S1 * ow1:_S1, :])
    patches1 = jnp.concatenate(cols, axis=-1)                       # [Np, oh1, ow1, k1len]
    taps = []
    for i in range(_K2):
        for j in range(_K2):
            taps.append(patches1[:, i:i + _S2 * oh2:_S2,
                                 j:j + _S2 * ow2:_S2, :])
    p1x = jnp.stack(taps, axis=3)                                   # [Np, oh2, ow2, t2, k1len]
    p1x = p1x.reshape(n_pad, n_pos, t2 * k1len)
    p1x = p1x.reshape(n_blocks, nb, n_pos, t2 * k1len)
    p1x = jnp.transpose(p1x, (0, 2, 1, 3))                          # [blk, s, n_w, 144]
    p1x = p1x.reshape(n_blocks * n_pos * nb,
                      t2 * k1len).astype(kparams["w1bd"].dtype)

    rows_per_blk = n_pos * nb

    def full_spec(a):
        return pl.BlockSpec(a.shape, lambda i: (0,) * a.ndim)

    out = pl.pallas_call(
        _encoder_fused_kernel,
        out_shape=jax.ShapeDtypeStruct((n_pad, lat2), jnp.float32),
        grid=(n_blocks,),
        in_specs=[
            pl.BlockSpec((rows_per_blk, t2 * k1len), lambda i: (i, 0)),
            full_spec(kparams["w1bd"]), full_spec(kparams["b1"]),
            full_spec(kparams["w2"]), full_spec(kparams["b2"]),
            full_spec(kparams["wh"]), full_spec(kparams["bh"]),
        ],
        out_specs=pl.BlockSpec((nb, lat2), lambda i: (i, 0)),
        scratch_shapes=[pltpu.VMEM((nb, n_pos * c2), jnp.float32)],
        compiler_params=pltpu.CompilerParams(
            dimension_semantics=("parallel",)),
    )(p1x, kparams["w1bd"], kparams["b1"], kparams["w2"], kparams["b2"],
      kparams["wh"], kparams["bh"])

    mean = out[:n, :latent]
    logvar = out[:n, latent:]
    return mean, logvar


# ----------------------------------------------------------------------------
# Pure-JAX reference (PyTorch-layout params, float32 throughout)
# ----------------------------------------------------------------------------
def encoder_reference(params, x):
    dn = ("NCHW", "OIHW", "NCHW")
    h = lax.conv_general_dilated(x, params["conv1_w"], (_S1, _S1), "VALID",
                                 dimension_numbers=dn)
    h = jnp.maximum(h + params["conv1_b"][None, :, None, None], 0.0)
    h = lax.conv_general_dilated(h, params["conv2_w"], (_S2, _S2), "VALID",
                                 dimension_numbers=dn)
    h = jnp.maximum(h + params["conv2_b"][None, :, None, None], 0.0)
    f = h.reshape(x.shape[0], -1)                      # PyTorch x.view(N, -1)
    mean = f @ params["zmean_w"].T + params["zmean_b"]
    logvar = f @ params["zlogvar_w"].T + params["zlogvar_b"]
    return mean, logvar


if __name__ == "__main__":
    key = jax.random.PRNGKey(0)
    k_param, k_input = jax.random.split(key)

    X_DIM = (1, 28, 28)   # default MNIST-like input [C, H, W]
    LATENT = 16
    BATCH = 2

    params, conv_out = init_encoder_params(k_param, X_DIM, LATENT)
    kparams = pack_params(params)
    x = jax.random.normal(k_input, (BATCH,) + X_DIM, jnp.float32)   # [N, C, H, W]

    fwd = jax.jit(encoder_forward)
    mean, logvar = jax.block_until_ready(fwd(kparams, x))

    assert mean.shape == (BATCH, LATENT), mean.shape
    assert logvar.shape == (BATCH, LATENT), logvar.shape
    assert mean.dtype == jnp.float32 and logvar.dtype == jnp.float32

    # Correctness vs. the float32 pure-JAX reference (kernel matmuls use bf16
    # operands with f32 accumulation -> loose tolerance).
    ref_mean, ref_logvar = encoder_reference(params, x)
    assert jnp.allclose(mean, ref_mean, atol=2e-2, rtol=2e-2)
    assert jnp.allclose(logvar, ref_logvar, atol=2e-2, rtol=2e-2)

    print("KERNEL_OK")
</pallas_src>

<mosaic_0001>
module attributes {stable_mosaic.version = 11 : i64} {
  func.func @_encoder_fused_kernel(%arg0: i32, %arg1: memref<288x144xbf16, #tpu.memory_space<vmem>>, %arg2: memref<144x288xbf16, #tpu.memory_space<vmem>>, %arg3: memref<1x288xf32, #tpu.memory_space<vmem>>, %arg4: memref<288x32xbf16, #tpu.memory_space<vmem>>, %arg5: memref<1x32xf32, #tpu.memory_space<vmem>>, %arg6: memref<1152x32xbf16, #tpu.memory_space<vmem>>, %arg7: memref<1x32xf32, #tpu.memory_space<vmem>>, %arg8: memref<8x32xf32, #tpu.memory_space<vmem>>, %arg9: memref<8x1152xf32, #tpu.memory_space<vmem>>) attributes {dimension_semantics = [#tpu.dimension_semantics<parallel>], iteration_bounds = array<i64: 1>, scalar_prefetch = 0 : i64, scratch_operands = 1 : i64, tpu.core_type = #tpu.core_type<tc>, window_params = [{transform_indices = @transform_0, window_bounds = array<i64: 288, 144>}, {pipeline_mode = #tpu.pipeline_mode<synchronous>, transform_indices = @transform_1, window_bounds = array<i64: 144, 288>}, {pipeline_mode = #tpu.pipeline_mode<synchronous>, transform_indices = @transform_2, window_bounds = array<i64: 1, 288>}, {pipeline_mode = #tpu.pipeline_mode<synchronous>, transform_indices = @transform_3, window_bounds = array<i64: 288, 32>}, {pipeline_mode = #tpu.pipeline_mode<synchronous>, transform_indices = @transform_4, window_bounds = array<i64: 1, 32>}, {pipeline_mode = #tpu.pipeline_mode<synchronous>, transform_indices = @transform_5, window_bounds = array<i64: 1152, 32>}, {pipeline_mode = #tpu.pipeline_mode<synchronous>, transform_indices = @transform_6, window_bounds = array<i64: 1, 32>}, {transform_indices = @transform_7, window_bounds = array<i64: 8, 32>}]} {
    %c0 = arith.constant 0 : index
    %c0_0 = arith.constant 0 : index
    %0 = vector.load %arg1[%c0, %c0_0] : memref<288x144xbf16, #tpu.memory_space<vmem>>, vector<288x144xbf16>
    %c0_1 = arith.constant 0 : index
    %c0_2 = arith.constant 0 : index
    %1 = vector.load %arg2[%c0_1, %c0_2] : memref<144x288xbf16, #tpu.memory_space<vmem>>, vector<144x288xbf16>
    %cst = arith.constant dense<0.000000e+00> : vector<288x288xf32>
    %2 = tpu.matmul %0, %1, %cst {dimension_numbers = #tpu.dot_dimension_numbers<[1], [0], [0], [1], [0, 0, 1, 1], [], []>} : vector<288x144xbf16>, vector<144x288xbf16>, vector<288x288xf32> -> vector<288x288xf32>
    %c0_3 = arith.constant 0 : index
    %c0_4 = arith.constant 0 : index
    %3 = vector.load %arg3[%c0_3, %c0_4] : memref<1x288xf32, #tpu.memory_space<vmem>>, vector<1x288xf32>
    %4 = vector.broadcast %3 : vector<1x288xf32> to vector<288x288xf32>
    %5 = arith.addf %2, %4 : vector<288x288xf32>
    %cst_5 = arith.constant 0.000000e+00 : f32
    %6 = vector.broadcast %cst_5 : f32 to vector<288x288xf32>
    %7 = arith.maximumf %5, %6 : vector<288x288xf32>
    %8 = arith.truncf %7 : vector<288x288xf32> to vector<288x288xbf16>
    %c0_6 = arith.constant 0 : index
    %c0_7 = arith.constant 0 : index
    %9 = vector.load %arg4[%c0_6, %c0_7] : memref<288x32xbf16, #tpu.memory_space<vmem>>, vector<288x32xbf16>
    %cst_8 = arith.constant dense<0.000000e+00> : vector<288x32xf32>
    %10 = tpu.matmul %8, %9, %cst_8 {dimension_numbers = #tpu.dot_dimension_numbers<[1], [0], [0], [1], [0, 0, 1, 1], [], []>} : vector<288x288xbf16>, vector<288x32xbf16>, vector<288x32xf32> -> vector<288x32xf32>
    %c0_9 = arith.constant 0 : index
    %c0_10 = arith.constant 0 : index
    %11 = vector.load %arg5[%c0_9, %c0_10] : memref<1x32xf32, #tpu.memory_space<vmem>>, vector<1x32xf32>
    %12 = vector.broadcast %11 : vector<1x32xf32> to vector<288x32xf32>
    %13 = arith.addf %10, %12 : vector<288x32xf32>
    %cst_11 = arith.constant 0.000000e+00 : f32
    %14 = vector.broadcast %cst_11 : f32 to vector<288x32xf32>
    %15 = arith.maximumf %13, %14 : vector<288x32xf32>
    %16 = vector.extract_strided_slice %15 {offsets = [0, 0], sizes = [8, 32], strides = [1, 1]} : vector<288x32xf32> to vector<8x32xf32>
    %c0_12 = arith.constant 0 : index
    %c0_13 = arith.constant 0 : index
    %17 = vector.load %arg9[%c0_12, %c0_13] : memref<8x1152xf32, #tpu.memory_space<vmem>>, vector<8x32xf32>
    tpu.vector_store %arg9[%c0_12, %c0_13], %16 {strides = array<i32>} : memref<8x1152xf32, #tpu.memory_space<vmem>>, vector<8x32xf32>,
    %18 = vector.extract_strided_slice %15 {offsets = [8, 0], sizes = [8, 32], strides = [1, 1]} : vector<288x32xf32> to vector<8x32xf32>
    %c0_14 = arith.constant 0 : index
    %c32 = arith.constant 32 : index
    %19 = vector.load %arg9[%c0_14, %c32] : memref<8x1152xf32, #tpu.memory_space<vmem>>, vector<8x32xf32>
    tpu.vector_store %arg9[%c0_14, %c32], %18 {strides = array<i32>} : memref<8x1152xf32, #tpu.memory_space<vmem>>, vector<8x32xf32>,
    %20 = vector.extract_strided_slice %15 {offsets = [16, 0], sizes = [8, 32], strides = [1, 1]} : vector<288x32xf32> to vector<8x32xf32>
    %c0_15 = arith.constant 0 : index
    %c64 = arith.constant 64 : index
    %21 = vector.load %arg9[%c0_15, %c64] : memref<8x1152xf32, #tpu.memory_space<vmem>>, vector<8x32xf32>
    tpu.vector_store %arg9[%c0_15, %c64], %20 {strides = array<i32>} : memref<8x1152xf32, #tpu.memory_space<vmem>>, vector<8x32xf32>,
    %22 = vector.extract_strided_slice %15 {offsets = [24, 0], sizes = [8, 32], strides = [1, 1]} : vector<288x32xf32> to vector<8x32xf32>
    %c0_16 = arith.constant 0 : index
    %c96 = arith.constant 96 : index
    %23 = vector.load %arg9[%c0_16, %c96] : memref<8x1152xf32, #tpu.memory_space<vmem>>, vector<8x32xf32>
    tpu.vector_store %arg9[%c0_16, %c96], %22 {strides = array<i32>} : memref<8x1152xf32, #tpu.memory_space<vmem>>, vector<8x32xf32>,
    %24 = vector.extract_strided_slice %15 {offsets = [32, 0], sizes = [8, 32], strides = [1, 1]} : vector<288x32xf32> to vector<8x32xf32>
    %c0_17 = arith.constant 0 : index
    %c128 = arith.constant 128 : index
    %25 = vector.load %arg9[%c0_17, %c128] : memref<8x1152xf32, #tpu.memory_space<vmem>>, vector<8x32xf32>
    tpu.vector_store %arg9[%c0_17, %c128], %24 {strides = array<i32>} : memref<8x1152xf32, #tpu.memory_space<vmem>>, vector<8x32xf32>,
    %26 = vector.extract_strided_slice %15 {offsets = [40, 0], sizes = [8, 32], strides = [1, 1]} : vector<288x32xf32> to vector<8x32xf32>
    %c0_18 = arith.constant 0 : index
    %c160 = arith.constant 160 : index
    %27 = vector.load %arg9[%c0_18, %c160] : memref<8x1152xf32, #tpu.memory_space<vmem>>, vector<8x32xf32>
    tpu.vector_store %arg9[%c0_18, %c160], %26 {strides = array<i32>} : memref<8x1152xf32, #tpu.memory_space<vmem>>, vector<8x32xf32>,
    %28 = vector.extract_strided_slice %15 {offsets = [48, 0], sizes = [8, 32], strides = [1, 1]} : vector<288x32xf32> to vector<8x32xf32>
    %c0_19 = arith.constant 0 : index
    %c192 = arith.constant 192 : index
    %29 = vector.load %arg9[%c0_19, %c192] : memref<8x1152xf32, #tpu.memory_space<vmem>>, vector<8x32xf32>
    tpu.vector_store %arg9[%c0_19, %c192], %28 {strides = array<i32>} : memref<8x1152xf32, #tpu.memory_space<vmem>>, vector<8x32xf32>,
    %30 = vector.extract_strided_slice %15 {offsets = [56, 0], sizes = [8, 32], strides = [1, 1]} : vector<288x32xf32> to vector<8x32xf32>
    %c0_20 = arith.constant 0 : index
    %c224 = arith.constant 224 : index
    %31 = vector.load %arg9[%c0_20, %c224] : memref<8x1152xf32, #tpu.memory_space<vmem>>, vector<8x32xf32>
    tpu.vector_store %arg9[%c0_20, %c224], %30 {strides = array<i32>} : memref<8x1152xf32, #tpu.memory_space<vmem>>, vector<8x32xf32>,
    %32 = vector.extract_strided_slice %15 {offsets = [64, 0], sizes = [8, 32], strides = [1, 1]} : vector<288x32xf32> to vector<8x32xf32>
    %c0_21 = arith.constant 0 : index
    %c256 = arith.constant 256 : index
    %33 = vector.load %arg9[%c0_21, %c256] : memref<8x1152xf32, #tpu.memory_space<vmem>>, vector<8x32xf32>
    tpu.vector_store %arg9[%c0_21, %c256], %32 {strides = array<i32>} : memref<8x1152xf32, #tpu.memory_space<vmem>>, vector<8x32xf32>,
    %34 = vector.extract_strided_slice %15 {offsets = [72, 0], sizes = [8, 32], strides = [1, 1]} : vector<288x32xf32> to vector<8x32xf32>
    %c0_22 = arith.constant 0 : index
    %c288 = arith.constant 288 : index
    %35 = vector.load %arg9[%c0_22, %c288] : memref<8x1152xf32, #tpu.memory_space<vmem>>, vector<8x32xf32>
    tpu.vector_store %arg9[%c0_22, %c288], %34 {strides = array<i32>} : memref<8x1152xf32, #tpu.memory_space<vmem>>, vector<8x32xf32>,
    %36 = vector.extract_strided_slice %15 {offsets = [80, 0], sizes = [8, 32], strides = [1, 1]} : vector<288x32xf32> to vector<8x32xf32>
    %c0_23 = arith.constant 0 : index
    %c320 = arith.constant 320 : index
    %37 = vector.load %arg9[%c0_23, %c320] : memref<8x1152xf32, #tpu.memory_space<vmem>>, vector<8x32xf32>
    tpu.vector_store %arg9[%c0_23, %c320], %36 {strides = array<i32>} : memref<8x1152xf32, #tpu.memory_space<vmem>>, vector<8x32xf32>,
    %38 = vector.extract_strided_slice %15 {offsets = [88, 0], sizes = [8, 32], strides = [1, 1]} : vector<288x32xf32> to vector<8x32xf32>
    %c0_24 = arith.constant 0 : index
    %c352 = arith.constant 352 : index
    %39 = vector.load %arg9[%c0_24, %c352] : memref<8x1152xf32, #tpu.memory_space<vmem>>, vector<8x32xf32>
    tpu.vector_store %arg9[%c0_24, %c352], %38 {strides = array<i32>} : memref<8x1152xf32, #tpu.memory_space<vmem>>, vector<8x32xf32>,
    %40 = vector.extract_strided_slice %15 {offsets = [96, 0], sizes = [8, 32], strides = [1, 1]} : vector<288x32xf32> to vector<8x32xf32>
    %c0_25 = arith.constant 0 : index
    %c384 = arith.constant 384 : index
    %41 = vector.load %arg9[%c0_25, %c384] : memref<8x1152xf32, #tpu.memory_space<vmem>>, vector<8x32xf32>
    tpu.vector_store %arg9[%c0_25, %c384], %40 {strides = array<i32>} : memref<8x1152xf32, #tpu.memory_space<vmem>>, vector<8x32xf32>,
    %42 = vector.extract_strided_slice %15 {offsets = [104, 0], sizes = [8, 32], strides = [1, 1]} : vector<288x32xf32> to vector<8x32xf32>
    %c0_26 = arith.constant 0 : index
    %c416 = arith.constant 416 : index
    %43 = vector.load %arg9[%c0_26, %c416] : memref<8x1152xf32, #tpu.memory_space<vmem>>, vector<8x32xf32>
    tpu.vector_store %arg9[%c0_26, %c416], %42 {strides = array<i32>} : memref<8x1152xf32, #tpu.memory_space<vmem>>, vector<8x32xf32>,
    %44 = vector.extract_strided_slice %15 {offsets = [112, 0], sizes = [8, 32], strides = [1, 1]} : vector<288x32xf32> to vector<8x32xf32>
    %c0_27 = arith.constant 0 : index
    %c448 = arith.constant 448 : index
    %45 = vector.load %arg9[%c0_27, %c448] : memref<8x1152xf32, #tpu.memory_space<vmem>>, vector<8x32xf32>
    tpu.vector_store %arg9[%c0_27, %c448], %44 {strides = array<i32>} : memref<8x1152xf32, #tpu.memory_space<vmem>>, vector<8x32xf32>,
    %46 = vector.extract_strided_slice %15 {offsets = [120, 0], sizes = [8, 32], strides = [1, 1]} : vector<288x32xf32> to vector<8x32xf32>
    %c0_28 = arith.constant 0 : index
    %c480 = arith.constant 480 : index
    %47 = vector.load %arg9[%c0_28, %c480] : memref<8x1152xf32, #tpu.memory_space<vmem>>, vector<8x32xf32>
    tpu.vector_store %arg9[%c0_28, %c480], %46 {strides = array<i32>} : memref<8x1152xf32, #tpu.memory_space<vmem>>, vector<8x32xf32>,
    %48 = vector.extract_strided_slice %15 {offsets = [128, 0], sizes = [8, 32], strides = [1, 1]} : vector<288x32xf32> to vector<8x32xf32>
    %c0_29 = arith.constant 0 : index
    %c512 = arith.constant 512 : index
    %49 = vector.load %arg9[%c0_29, %c512] : memref<8x1152xf32, #tpu.memory_space<vmem>>, vector<8x32xf32>
    tpu.vector_store %arg9[%c0_29, %c512], %48 {strides = array<i32>} : memref<8x1152xf32, #tpu.memory_space<vmem>>, vector<8x32xf32>,
    %50 = vector.extract_strided_slice %15 {offsets = [136, 0], sizes = [8, 32], strides = [1, 1]} : vector<288x32xf32> to vector<8x32xf32>
    %c0_30 = arith.constant 0 : index
    %c544 = arith.constant 544 : index
    %51 = vector.load %arg9[%c0_30, %c544] : memref<8x1152xf32, #tpu.memory_space<vmem>>, vector<8x32xf32>
    tpu.vector_store %arg9[%c0_30, %c544], %50 {strides = array<i32>} : memref<8x1152xf32, #tpu.memory_space<vmem>>, vector<8x32xf32>,
    %52 = vector.extract_strided_slice %15 {offsets = [144, 0], sizes = [8, 32], strides = [1, 1]} : vector<288x32xf32> to vector<8x32xf32>
    %c0_31 = arith.constant 0 : index
    %c576 = arith.constant 576 : index
    %53 = vector.load %arg9[%c0_31, %c576] : memref<8x1152xf32, #tpu.memory_space<vmem>>, vector<8x32xf32>
    tpu.vector_store %arg9[%c0_31, %c576], %52 {strides = array<i32>} : memref<8x1152xf32, #tpu.memory_space<vmem>>, vector<8x32xf32>,
    %54 = vector.extract_strided_slice %15 {offsets = [152, 0], sizes = [8, 32], strides = [1, 1]} : vector<288x32xf32> to vector<8x32xf32>
    %c0_32 = arith.constant 0 : index
    %c608 = arith.constant 608 : index
    %55 = vector.load %arg9[%c0_32, %c608] : memref<8x1152xf32, #tpu.memory_space<vmem>>, vector<8x32xf32>
    tpu.vector_store %arg9[%c0_32, %c608], %54 {strides = array<i32>} : memref<8x1152xf32, #tpu.memory_space<vmem>>, vector<8x32xf32>,
    %56 = vector.extract_strided_slice %15 {offsets = [160, 0], sizes = [8, 32], strides = [1, 1]} : vector<288x32xf32> to vector<8x32xf32>
    %c0_33 = arith.constant 0 : index
    %c640 = arith.constant 640 : index
    %57 = vector.load %arg9[%c0_33, %c640] : memref<8x1152xf32, #tpu.memory_space<vmem>>, vector<8x32xf32>
    tpu.vector_store %arg9[%c0_33, %c640], %56 {strides = array<i32>} : memref<8x1152xf32, #tpu.memory_space<vmem>>, vector<8x32xf32>,
    %58 = vector.extract_strided_slice %15 {offsets = [168, 0], sizes = [8, 32], strides = [1, 1]} : vector<288x32xf32> to vector<8x32xf32>
    %c0_34 = arith.constant 0 : index
    %c672 = arith.constant 672 : index
    %59 = vector.load %arg9[%c0_34, %c672] : memref<8x1152xf32, #tpu.memory_space<vmem>>, vector<8x32xf32>
    tpu.vector_store %arg9[%c0_34, %c672], %58 {strides = array<i32>} : memref<8x1152xf32, #tpu.memory_space<vmem>>, vector<8x32xf32>,
    %60 = vector.extract_strided_slice %15 {offsets = [176, 0], sizes = [8, 32], strides = [1, 1]} : vector<288x32xf32> to vector<8x32xf32>
    %c0_35 = arith.constant 0 : index
    %c704 = arith.constant 704 : index
    %61 = vector.load %arg9[%c0_35, %c704] : memref<8x1152xf32, #tpu.memory_space<vmem>>, vector<8x32xf32>
    tpu.vector_store %arg9[%c0_35, %c704], %60 {strides = array<i32>} : memref<8x1152xf32, #tpu.memory_space<vmem>>, vector<8x32xf32>,
    %62 = vector.extract_strided_slice %15 {offsets = [184, 0], sizes = [8, 32], strides = [1, 1]} : vector<288x32xf32> to vector<8x32xf32>
    %c0_36 = arith.constant 0 : index
    %c736 = arith.constant 736 : index
    %63 = vector.load %arg9[%c0_36, %c736] : memref<8x1152xf32, #tpu.memory_space<vmem>>, vector<8x32xf32>
    tpu.vector_store %arg9[%c0_36, %c736], %62 {strides = array<i32>} : memref<8x1152xf32, #tpu.memory_space<vmem>>, vector<8x32xf32>,
    %64 = vector.extract_strided_slice %15 {offsets = [192, 0], sizes = [8, 32], strides = [1, 1]} : vector<288x32xf32> to vector<8x32xf32>
    %c0_37 = arith.constant 0 : index
    %c768 = arith.constant 768 : index
    %65 = vector.load %arg9[%c0_37, %c768] : memref<8x1152xf32, #tpu.memory_space<vmem>>, vector<8x32xf32>
    tpu.vector_store %arg9[%c0_37, %c768], %64 {strides = array<i32>} : memref<8x1152xf32, #tpu.memory_space<vmem>>, vector<8x32xf32>,
    %66 = vector.extract_strided_slice %15 {offsets = [200, 0], sizes = [8, 32], strides = [1, 1]} : vector<288x32xf32> to vector<8x32xf32>
    %c0_38 = arith.constant 0 : index
    %c800 = arith.constant 800 : index
    %67 = vector.load %arg9[%c0_38, %c800] : memref<8x1152xf32, #tpu.memory_space<vmem>>, vector<8x32xf32>
    tpu.vector_store %arg9[%c0_38, %c800], %66 {strides = array<i32>} : memref<8x1152xf32, #tpu.memory_space<vmem>>, vector<8x32xf32>,
    %68 = vector.extract_strided_slice %15 {offsets = [208, 0], sizes = [8, 32], strides = [1, 1]} : vector<288x32xf32> to vector<8x32xf32>
    %c0_39 = arith.constant 0 : index
    %c832 = arith.constant 832 : index
    %69 = vector.load %arg9[%c0_39, %c832] : memref<8x1152xf32, #tpu.memory_space<vmem>>, vector<8x32xf32>
    tpu.vector_store %arg9[%c0_39, %c832], %68 {strides = array<i32>} : memref<8x1152xf32, #tpu.memory_space<vmem>>, vector<8x32xf32>,
    %70 = vector.extract_strided_slice %15 {offsets = [216, 0], sizes = [8, 32], strides = [1, 1]} : vector<288x32xf32> to vector<8x32xf32>
    %c0_40 = arith.constant 0 : index
    %c864 = arith.constant 864 : index
    %71 = vector.load %arg9[%c0_40, %c864] : memref<8x1152xf32, #tpu.memory_space<vmem>>, vector<8x32xf32>
    tpu.vector_store %arg9[%c0_40, %c864], %70 {strides = array<i32>} : memref<8x1152xf32, #tpu.memory_space<vmem>>, vector<8x32xf32>,
    %72 = vector.extract_strided_slice %15 {offsets = [224, 0], sizes = [8, 32], strides = [1, 1]} : vector<288x32xf32> to vector<8x32xf32>
    %c0_41 = arith.constant 0 : index
    %c896 = arith.constant 896 : index
    %73 = vector.load %arg9[%c0_41, %c896] : memref<8x1152xf32, #tpu.memory_space<vmem>>, vector<8x32xf32>
    tpu.vector_store %arg9[%c0_41, %c896], %72 {strides = array<i32>} : memref<8x1152xf32, #tpu.memory_space<vmem>>, vector<8x32xf32>,
    %74 = vector.extract_strided_slice %15 {offsets = [232, 0], sizes = [8, 32], strides = [1, 1]} : vector<288x32xf32> to vector<8x32xf32>
    %c0_42 = arith.constant 0 : index
    %c928 = arith.constant 928 : index
    %75 = vector.load %arg9[%c0_42, %c928] : memref<8x1152xf32, #tpu.memory_space<vmem>>, vector<8x32xf32>
    tpu.vector_store %arg9[%c0_42, %c928], %74 {strides = array<i32>} : memref<8x1152xf32, #tpu.memory_space<vmem>>, vector<8x32xf32>,
    %76 = vector.extract_strided_slice %15 {offsets = [240, 0], sizes = [8, 32], strides = [1, 1]} : vector<288x32xf32> to vector<8x32xf32>
    %c0_43 = arith.constant 0 : index
    %c960 = arith.constant 960 : index
    %77 = vector.load %arg9[%c0_43, %c960] : memref<8x1152xf32, #tpu.memory_space<vmem>>, vector<8x32xf32>
    tpu.vector_store %arg9[%c0_43, %c960], %76 {strides = array<i32>} : memref<8x1152xf32, #tpu.memory_space<vmem>>, vector<8x32xf32>,
    %78 = vector.extract_strided_slice %15 {offsets = [248, 0], sizes = [8, 32], strides = [1, 1]} : vector<288x32xf32> to vector<8x32xf32>
    %c0_44 = arith.constant 0 : index
    %c992 = arith.constant 992 : index
    %79 = vector.load %arg9[%c0_44, %c992] : memref<8x1152xf32, #tpu.memory_space<vmem>>, vector<8x32xf32>
    tpu.vector_store %arg9[%c0_44, %c992], %78 {strides = array<i32>} : memref<8x1152xf32, #tpu.memory_space<vmem>>, vector<8x32xf32>,
    %80 = vector.extract_strided_slice %15 {offsets = [256, 0], sizes = [8, 32], strides = [1, 1]} : vector<288x32xf32> to vector<8x32xf32>
    %c0_45 = arith.constant 0 : index
    %c1024 = arith.constant 1024 : index
    %81 = vector.load %arg9[%c0_45, %c1024] : memref<8x1152xf32, #tpu.memory_space<vmem>>, vector<8x32xf32>
    tpu.vector_store %arg9[%c0_45, %c1024], %80 {strides = array<i32>} : memref<8x1152xf32, #tpu.memory_space<vmem>>, vector<8x32xf32>,
    %82 = vector.extract_strided_slice %15 {offsets = [264, 0], sizes = [8, 32], strides = [1, 1]} : vector<288x32xf32> to vector<8x32xf32>
    %c0_46 = arith.constant 0 : index
    %c1056 = arith.constant 1056 : index
    %83 = vector.load %arg9[%c0_46, %c1056] : memref<8x1152xf32, #tpu.memory_space<vmem>>, vector<8x32xf32>
    tpu.vector_store %arg9[%c0_46, %c1056], %82 {strides = array<i32>} : memref<8x1152xf32, #tpu.memory_space<vmem>>, vector<8x32xf32>,
    %84 = vector.extract_strided_slice %15 {offsets = [272, 0], sizes = [8, 32], strides = [1, 1]} : vector<288x32xf32> to vector<8x32xf32>
    %c0_47 = arith.constant 0 : index
    %c1088 = arith.constant 1088 : index
    %85 = vector.load %arg9[%c0_47, %c1088] : memref<8x1152xf32, #tpu.memory_space<vmem>>, vector<8x32xf32>
    tpu.vector_store %arg9[%c0_47, %c1088], %84 {strides = array<i32>} : memref<8x1152xf32, #tpu.memory_space<vmem>>, vector<8x32xf32>,
    %86 = vector.extract_strided_slice %15 {offsets = [280, 0], sizes = [8, 32], strides = [1, 1]} : vector<288x32xf32> to vector<8x32xf32>
    %c0_48 = arith.constant 0 : index
    %c1120 = arith.constant 1120 : index
    %87 = vector.load %arg9[%c0_48, %c1120] : memref<8x1152xf32, #tpu.memory_space<vmem>>, vector<8x32xf32>
    tpu.vector_store %arg9[%c0_48, %c1120], %86 {strides = array<i32>} : memref<8x1152xf32, #tpu.memory_space<vmem>>, vector<8x32xf32>,
    %c0_49 = arith.constant 0 : index
    %c0_50 = arith.constant 0 : index
    %88 = vector.load %arg9[%c0_49, %c0_50] : memref<8x1152xf32, #tpu.memory_space<vmem>>, vector<8x1152xf32>
    %89 = arith.truncf %88 : vector<8x1152xf32> to vector<8x1152xbf16>
    %c0_51 = arith.constant 0 : index
    %c0_52 = arith.constant 0 : index
    %90 = vector.load %arg6[%c0_51, %c0_52] : memref<1152x32xbf16, #tpu.memory_space<vmem>>, vector<1152x32xbf16>
    %cst_53 = arith.constant dense<0.000000e+00> : vector<8x32xf32>
    %91 = tpu.matmul %89, %90, %cst_53 {dimension_numbers = #tpu.dot_dimension_numbers<[1], [0], [0], [1], [0, 0, 1, 1], [], []>} : vector<8x1152xbf16>, vector<1152x32xbf16>, vector<8x32xf32> -> vector<8x32xf32>
    %c0_54 = arith.constant 0 : index
    %c0_55 = arith.constant 0 : index
    %92 = vector.load %arg7[%c0_54, %c0_55] : memref<1x32xf32, #tpu.memory_space<vmem>>, vector<1x32xf32>
    %93 = vector.broadcast %92 : vector<1x32xf32> to vector<8x32xf32>
    %94 = arith.addf %91, %93 : vector<8x32xf32>
    %c0_56 = arith.constant 0 : index
    %c0_57 = arith.constant 0 : index
    %95 = vector.load %arg8[%c0_56, %c0_57] : memref<8x32xf32, #tpu.memory_space<vmem>>, vector<8x32xf32>
    tpu.vector_store %arg8[%c0_56, %c0_57], %94 {strides = array<i32>} : memref<8x32xf32, #tpu.memory_space<vmem>>, vector<8x32xf32>,
    return
  }
  func.func @transform_0(%arg0: i32) -> (i32, i32) {
    %c0_i32 = arith.constant 0 : i32
    %c0_i32_0 = arith.constant 0 : i32
    return %arg0, %c0_i32 : i32, i32
  }
  func.func @transform_1(%arg0: i32) -> (i32, i32) {
    %c0_i32 = arith.constant 0 : i32
    %c0_i32_0 = arith.constant 0 : i32
    %c0_i32_1 = arith.constant 0 : i32
    return %c0_i32, %c0_i32_0 : i32, i32
  }
  func.func @transform_2(%arg0: i32) -> (i32, i32) {
    %c0_i32 = arith.constant 0 : i32
    %c0_i32_0 = arith.constant 0 : i32
    %c0_i32_1 = arith.constant 0 : i32
    return %c0_i32, %c0_i32_0 : i32, i32
  }
  func.func @transform_3(%arg0: i32) -> (i32, i32) {
    %c0_i32 = arith.constant 0 : i32
    %c0_i32_0 = arith.constant 0 : i32
    %c0_i32_1 = arith.constant 0 : i32
    return %c0_i32, %c0_i32_0 : i32, i32
  }
  func.func @transform_4(%arg0: i32) -> (i32, i32) {
    %c0_i32 = arith.constant 0 : i32
    %c0_i32_0 = arith.constant 0 : i32
    %c0_i32_1 = arith.constant 0 : i32
    return %c0_i32, %c0_i32_0 : i32, i32
  }
  func.func @transform_5(%arg0: i32) -> (i32, i32) {
    %c0_i32 = arith.constant 0 : i32
    %c0_i32_0 = arith.constant 0 : i32
    %c0_i32_1 = arith.constant 0 : i32
    return %c0_i32, %c0_i32_0 : i32, i32
  }
  func.func @transform_6(%arg0: i32) -> (i32, i32) {
    %c0_i32 = arith.constant 0 : i32
    %c0_i32_0 = arith.constant 0 : i32
    %c0_i32_1 = arith.constant 0 : i32
    return %c0_i32, %c0_i32_0 : i32, i32
  }
  func.func @transform_7(%arg0: i32) -> (i32, i32) {
    %c0_i32 = arith.constant 0 : i32
    %c0_i32_0 = arith.constant 0 : i32
    return %arg0, %c0_i32 : i32, i32
  }
}

</mosaic_0001>

<llo_original>
// kernel: encoder_forward.1
$region0: #{encoder_forward.1}
  #allocation0 [shape = 'u32[]', space=smem, size = 0x4, offset = 0x4, fixed_abs, tag = 'smem constant byte address 0x4 - core index']
  #allocation1 [shape = 'u32[144,128]{1,0:T(1,128)}', space=vmem, size = 0x12000, scoped, tag = 'internal scratch']
  #allocation2 [shape = 'f32[8,1152]{1,0:T(8,128)}', space=vmem, size = 0x9000, scoped, tag = 'scratch operand']
  %s0 = inlined_call_operand.vmem [shape: bf16[288,144], index: 0, kind: input, shape index: {}]
  %s1 = inlined_call_operand.vmem [shape: bf16[144,288], index: 1, kind: input, shape index: {}]
  %s2 = inlined_call_operand.vmem [shape: f32[1,288], index: 2, kind: input, shape index: {}]
  %s3 = inlined_call_operand.vmem [shape: bf16[288,32], index: 3, kind: input, shape index: {}]
  %s4 = inlined_call_operand.vmem [shape: f32[1,32], index: 4, kind: input, shape index: {}]
  %s5 = inlined_call_operand.vmem [shape: bf16[1152,32], index: 5, kind: input, shape index: {}]
  %s6 = inlined_call_operand.vmem [shape: f32[1,32], index: 6, kind: input, shape index: {}]
  %s7 = inlined_call_operand.vmem [shape: f32[8,32], index: 7, kind: output, shape index: {}]
  %s8 = sld [smem:[#allocation0]]
  $region38: #{encoder_forward.1} parent=0
    _
  %s10 = ssub.s32 1, %s8
  %s11 = scalar_select 0, %s10, %s8
  // Predicated region
  $region2: #{encoder_forward.1} parent=0 // pred_check
    _
  $region3: #{encoder_forward.1} parent=0 // pred_check_branch
    %13 = sbr.rel (0) target = $region5
  $region4: #{encoder_forward.1} parent=0 // pred_region
    _
  $region5: #{encoder_forward.1} parent=0 // pred_fallthru
    _
  // Predicated region
  $region6: #{encoder_forward.1} parent=0 // pred_check
    _
  $region7: #{encoder_forward.1} parent=0 // pred_check_branch
    %15 = sbr.rel (0) target = $region9
  $region8: #{encoder_forward.1} parent=0 // pred_region
    _
  $region9: #{encoder_forward.1} parent=0 // pred_fallthru
    _
  // Predicated region
  $region10: #{encoder_forward.1} parent=0 // pred_check
    _
  $region11: #{encoder_forward.1} parent=0 // pred_check_branch
    %17 = sbr.rel (0) target = $region13
  $region12: #{encoder_forward.1} parent=0 // pred_region
    _
  $region13: #{encoder_forward.1} parent=0 // pred_fallthru
    _
  // Predicated region
  $region14: #{encoder_forward.1} parent=0 // pred_check
    _
  $region15: #{encoder_forward.1} parent=0 // pred_check_branch
    %19 = sbr.rel (0) target = $region17
  $region16: #{encoder_forward.1} parent=0 // pred_region
    _
  $region17: #{encoder_forward.1} parent=0 // pred_fallthru
    _
  // Predicated region
  $region18: #{encoder_forward.1} parent=0 // pred_check
    _
  $region19: #{encoder_forward.1} parent=0 // pred_check_branch
    %21 = sbr.rel (0) target = $region21
  $region20: #{encoder_forward.1} parent=0 // pred_region
    _
  $region21: #{encoder_forward.1} parent=0 // pred_fallthru
    _
  // Predicated region
  $region22: #{encoder_forward.1} parent=0 // pred_check
    _
  $region23: #{encoder_forward.1} parent=0 // pred_check_branch
    %23 = sbr.rel (0) target = $region25
  $region24: #{encoder_forward.1} parent=0 // pred_region
    _
  $region25: #{encoder_forward.1} parent=0 // pred_fallthru
    _
  // Predicated region
  $region26: #{encoder_forward.1} parent=0 // pred_check
    _
  $region27: #{encoder_forward.1} parent=0 // pred_check_branch
    %25 = sbr.rel (0) target = $region29
  $region28: #{encoder_forward.1} parent=0 // pred_region
    _
  $region29: #{encoder_forward.1} parent=0 // pred_fallthru
    _
  %v27 = vld [vmem:[%s0] sm:$0xff]
  %v28 = vld [vmem:[%s0 + $0x8] sm:$0xff]
  %v29 = vld [vmem:[%s0 + $0x10] sm:$0xff]
  %v30 = vld [vmem:[%s0 + $0x18] sm:$0xff]
  %v31 = vld [vmem:[%s0 + $0x20] sm:$0xff]
  %v32 = vld [vmem:[%s0 + $0x28] sm:$0xff]
  %v33 = vld [vmem:[%s0 + $0x30] sm:$0xff]
  %v34 = vld [vmem:[%s0 + $0x38] sm:$0xff]
  %v35 = vld [vmem:[%s0 + $0x40] sm:$0xff]
  %v36 = vld [vmem:[%s0 + $0x48] sm:$0xff]
  %v37 = vld [vmem:[%s0 + $0x50] sm:$0xff]
  %v38 = vld [vmem:[%s0 + $0x58] sm:$0xff]
  %v39 = vld [vmem:[%s0 + $0x60] sm:$0xff]
  %v40 = vld [vmem:[%s0 + $0x68] sm:$0xff]
  %v41 = vld [vmem:[%s0 + $0x70] sm:$0xff]
  %v42 = vld [vmem:[%s0 + $0x78] sm:$0xff]
  %v43 = vld [vmem:[%s0 + $0x80] sm:$0xff]
  %v44 = vld [vmem:[%s0 + $0x88] sm:$0xff]
  %v45 = vld [vmem:[%s0 + $0x90] sm:$0xff]
  %v46 = vld [vmem:[%s0 + $0x98] sm:$0xff]
  %v47 = vld [vmem:[%s0 + $0xa0] sm:$0xff]
  %v48 = vld [vmem:[%s0 + $0xa8] sm:$0xff]
  %v49 = vld [vmem:[%s0 + $0xb0] sm:$0xff]
  %v50 = vld [vmem:[%s0 + $0xb8] sm:$0xff]
  %v51 = vld [vmem:[%s0 + $0xc0] sm:$0xff]
  %v52 = vld [vmem:[%s0 + $0xc8] sm:$0xff]
  %v53 = vld [vmem:[%s0 + $0xd0] sm:$0xff]
  %v54 = vld [vmem:[%s0 + $0xd8] sm:$0xff]
  %v55 = vld [vmem:[%s0 + $0xe0] sm:$0xff]
  %v56 = vld [vmem:[%s0 + $0xe8] sm:$0xff]
  %v57 = vld [vmem:[%s0 + $0xf0] sm:$0xff]
  %v58 = vld [vmem:[%s0 + $0xf8] sm:$0xff]
  %v59 = vld [vmem:[%s0 + $0x100] sm:$0xff]
  %v60 = vld [vmem:[%s0 + $0x108] sm:$0xff]
  %v61 = vld [vmem:[%s0 + $0x110] sm:$0xff]
  %v62 = vld [vmem:[%s0 + $0x118] sm:$0xff]
  %v63 = vld [vmem:[%s1] sm:$0xff]
  %v64 = vld [vmem:[%s1 + $0x8] sm:$0xf]
  %v65 = vld [vmem:[%s1 + $0xc] sm:$0xff]
  %v66 = vld [vmem:[%s1 + $0x14] sm:$0xf]
  %v67 = vld [vmem:[%s1 + $0x18] sm:$0xff]
  %v68 = vld [vmem:[%s1 + $0x20] sm:$0xf]
  %v69 = vld [vmem:[%s1 + $0x24] sm:$0xff]
  %v70 = vld [vmem:[%s1 + $0x2c] sm:$0xf]
  %v71 = vld [vmem:[%s1 + $0x30] sm:$0xff]
  %v72 = vld [vmem:[%s1 + $0x38] sm:$0xf]
  %v73 = vld [vmem:[%s1 + $0x3c] sm:$0xff]
  %v74 = vld [vmem:[%s1 + $0x44] sm:$0xf]
  %v75 = vld [vmem:[%s1 + $0x48] sm:$0xff]
  %v76 = vld [vmem:[%s1 + $0x50] sm:$0xf]
  %v77 = vld [vmem:[%s1 + $0x54] sm:$0xff]
  %v78 = vld [vmem:[%s1 + $0x5c] sm:$0xf]
  %v79 = vld [vmem:[%s1 + $0x60] sm:$0xff]
  %v80 = vld [vmem:[%s1 + $0x68] sm:$0xf]
  %v81 = vld [vmem:[%s1 + $0x6c] sm:$0xff]
  %v82 = vld [vmem:[%s1 + $0x74] sm:$0xf]
  %v83 = vld [vmem:[%s1 + $0x78] sm:$0xff]
  %v84 = vld [vmem:[%s1 + $0x80] sm:$0xf]
  %v85 = vld [vmem:[%s1 + $0x84] sm:$0xff]
  %v86 = vld [vmem:[%s1 + $0x8c] sm:$0xf]
  %v87 = vld [vmem:[%s1 + $0x90] sm:$0xff]
  %v88 = vld [vmem:[%s1 + $0x98] sm:$0xf]
  %v89 = vld [vmem:[%s1 + $0x9c] sm:$0xff]
  %v90 = vld [vmem:[%s1 + $0xa4] sm:$0xf]
  %v91 = vld [vmem:[%s1 + $0xa8] sm:$0xff]
  %v92 = vld [vmem:[%s1 + $0xb0] sm:$0xf]
  %v93 = vld [vmem:[%s1 + $0xb4] sm:$0xff]
  %v94 = vld [vmem:[%s1 + $0xbc] sm:$0xf]
  %v95 = vld [vmem:[%s1 + $0xc0] sm:$0xff]
  %v96 = vld [vmem:[%s1 + $0xc8] sm:$0xf]
  %v97 = vld [vmem:[%s1 + $0xcc] sm:$0xff]
  %v98 = vld [vmem:[%s1 + $0xd4] sm:$0xf]
  %v99 = vld [vmem:[%s2] sm:$0x7]
  %v101 = vlaneseq
  %v102 = vshrl.u32 %v101, 7
  %v103 = vsub.s32 0, %v102
  %v104 = vrot.slane %v99, %v103
  %v105 = vlaneseq
  %v106 = vshrl.u32 %v105, 7
  %v107 = vsub.s32 1, %v106
  %v108 = vrot.slane %v99, %v107
  %v109 = vlaneseq
  %v110 = vshrl.u32 %v109, 7
  %v111 = vsub.s32 2, %v110
  %v112 = vrot.slane %v99, %v111
  %v152 = vunpack.c.l.b16 %v27
  %v153 = vunpack.c.h.b16 %v27
  %v154 = vunpack.c.l.b16 %v28
  %v155 = vunpack.c.h.b16 %v28
  %v156 = vunpack.c.l.b16 %v29
  %v157 = vunpack.c.h.b16 %v29
  %v158 = vunpack.c.l.b16 %v30
  %v159 = vunpack.c.h.b16 %v30
  %v160 = vunpack.c.l.b16 %v31
  %v161 = vunpack.c.h.b16 %v31
  %v162 = vunpack.c.l.b16 %v32
  %v163 = vunpack.c.h.b16 %v32
  %v164 = vunpack.c.l.b16 %v33
  %v165 = vunpack.c.h.b16 %v33
  %v166 = vunpack.c.l.b16 %v34
  %v167 = vunpack.c.h.b16 %v34
  %v168 = vunpack.c.l.b16 %v35
  %v169 = vunpack.c.h.b16 %v35
  %v170 = vunpack.c.l.b16 %v36
  %v171 = vunpack.c.h.b16 %v36
  %v172 = vunpack.c.l.b16 %v37
  %v173 = vunpack.c.h.b16 %v37
  %v174 = vunpack.c.l.b16 %v38
  %v175 = vunpack.c.h.b16 %v38
  %v176 = vunpack.c.l.b16 %v39
  %v177 = vunpack.c.h.b16 %v39
  %v178 = vunpack.c.l.b16 %v40
  %v179 = vunpack.c.h.b16 %v40
  %v180 = vunpack.c.l.b16 %v41
  %v181 = vunpack.c.h.b16 %v41
  %v182 = vunpack.c.l.b16 %v42
  %v183 = vunpack.c.h.b16 %v42
  %v184 = vunpack.c.l.b16 %v43
  %v185 = vunpack.c.h.b16 %v43
  %v186 = vunpack.c.l.b16 %v44
  %v187 = vunpack.c.h.b16 %v44
  %v188 = vunpack.c.l.b16 %v45
  %v189 = vunpack.c.h.b16 %v45
  %v190 = vunpack.c.l.b16 %v46
  %v191 = vunpack.c.h.b16 %v46
  %v192 = vunpack.c.l.b16 %v47
  %v193 = vunpack.c.h.b16 %v47
  %v194 = vunpack.c.l.b16 %v48
  %v195 = vunpack.c.h.b16 %v48
  %v196 = vunpack.c.l.b16 %v49
  %v197 = vunpack.c.h.b16 %v49
  %v198 = vunpack.c.l.b16 %v50
  %v199 = vunpack.c.h.b16 %v50
  %v200 = vunpack.c.l.b16 %v51
  %v201 = vunpack.c.h.b16 %v51
  %v202 = vunpack.c.l.b16 %v52
  %v203 = vunpack.c.h.b16 %v52
  %v204 = vunpack.c.l.b16 %v53
  %v205 = vunpack.c.h.b16 %v53
  %v206 = vunpack.c.l.b16 %v54
  %v207 = vunpack.c.h.b16 %v54
  %v208 = vunpack.c.l.b16 %v55
  %v209 = vunpack.c.h.b16 %v55
  %v210 = vunpack.c.l.b16 %v56
  %v211 = vunpack.c.h.b16 %v56
  %v212 = vunpack.c.l.b16 %v57
  %v213 = vunpack.c.h.b16 %v57
  %v214 = vunpack.c.l.b16 %v58
  %v215 = vunpack.c.h.b16 %v58
  %v216 = vunpack.c.l.b16 %v59
  %v217 = vunpack.c.h.b16 %v59
  %v218 = vunpack.c.l.b16 %v60
  %v219 = vunpack.c.h.b16 %v60
  %v220 = vunpack.c.l.b16 %v61
  %v221 = vunpack.c.h.b16 %v61
  %v222 = vunpack.c.l.b16 %v62
  %v223 = vunpack.c.h.b16 %v62
  %v224 = vpack.c.b16 %v154, %v152
  %v225 = vpack.c.b16 %v155, %v153
  %v226 = vpack.c.b16 %v158, %v156
  %v227 = vpack.c.b16 %v159, %v157
  %v228 = vpack.c.b16 %v162, %v160
  %v229 = vpack.c.b16 %v163, %v161
  %v230 = vpack.c.b16 %v166, %v164
  %v231 = vpack.c.b16 %v167, %v165
  %v232 = vpack.c.b16 %v170, %v168
  %v233 = vpack.c.b16 %v171, %v169
  %v234 = vpack.c.b16 %v174, %v172
  %v235 = vpack.c.b16 %v175, %v173
  %v236 = vpack.c.b16 %v178, %v176
  %v237 = vpack.c.b16 %v179, %v177
  %v238 = vpack.c.b16 %v182, %v180
  %v239 = vpack.c.b16 %v183, %v181
  %v240 = vpack.c.b16 %v186, %v184
  %v241 = vpack.c.b16 %v187, %v185
  %v242 = vpack.c.b16 %v190, %v188
  %v243 = vpack.c.b16 %v191, %v189
  %v244 = vpack.c.b16 %v194, %v192
  %v245 = vpack.c.b16 %v195, %v193
  %v246 = vpack.c.b16 %v198, %v196
  %v247 = vpack.c.b16 %v199, %v197
  %v248 = vpack.c.b16 %v202, %v200
  %v249 = vpack.c.b16 %v203, %v201
  %v250 = vpack.c.b16 %v206, %v204
  %v251 = vpack.c.b16 %v207, %v205
  %v252 = vpack.c.b16 %v210, %v208
  %v253 = vpack.c.b16 %v211, %v209
  %v254 = vpack.c.b16 %v214, %v212
  %v255 = vpack.c.b16 %v215, %v213
  %v256 = vpack.c.b16 %v218, %v216
  %v257 = vpack.c.b16 %v219, %v217
  %v258 = vpack.c.b16 %v222, %v220
  %v259 = vpack.c.b16 %v223, %v221
  %v314 = vunpack.c.l.b16 %v63
  %v315 = vunpack.c.h.b16 %v63
  %v316 = vunpack.c.l.b16 %v64
  %v317 = vunpack.c.l.b16 %v65
  %v318 = vunpack.c.h.b16 %v65
  %v319 = vunpack.c.l.b16 %v66
  %v320 = vunpack.c.l.b16 %v67
  %v321 = vunpack.c.h.b16 %v67
  %v322 = vunpack.c.l.b16 %v68
  %v323 = vunpack.c.l.b16 %v69
  %v324 = vunpack.c.h.b16 %v69
  %v325 = vunpack.c.l.b16 %v70
  %v326 = vunpack.c.l.b16 %v71
  %v327 = vunpack.c.h.b16 %v71
  %v328 = vunpack.c.l.b16 %v72
  %v329 = vunpack.c.l.b16 %v73
  %v330 = vunpack.c.h.b16 %v73
  %v331 = vunpack.c.l.b16 %v74
  %v332 = vunpack.c.l.b16 %v75
  %v333 = vunpack.c.h.b16 %v75
  %v334 = vunpack.c.l.b16 %v76
  %v335 = vunpack.c.l.b16 %v77
  %v336 = vunpack.c.h.b16 %v77
  %v337 = vunpack.c.l.b16 %v78
  %v338 = vunpack.c.l.b16 %v79
  %v339 = vunpack.c.h.b16 %v79
  %v340 = vunpack.c.l.b16 %v80
  %v341 = vunpack.c.l.b16 %v81
  %v342 = vunpack.c.h.b16 %v81
  %v343 = vunpack.c.l.b16 %v82
  %v344 = vunpack.c.l.b16 %v83
  %v345 = vunpack.c.h.b16 %v83
  %v346 = vunpack.c.l.b16 %v84
  %v347 = vunpack.c.l.b16 %v85
  %v348 = vunpack.c.h.b16 %v85
  %v349 = vunpack.c.l.b16 %v86
  %v350 = vunpack.c.l.b16 %v87
  %v351 = vunpack.c.h.b16 %v87
  %v352 = vunpack.c.l.b16 %v88
  %v353 = vunpack.c.l.b16 %v89
  %v354 = vunpack.c.h.b16 %v89
  %v355 = vunpack.c.l.b16 %v90
  %v356 = vunpack.c.l.b16 %v91
  %v357 = vunpack.c.h.b16 %v91
  %v358 = vunpack.c.l.b16 %v92
  %v359 = vunpack.c.l.b16 %v93
  %v360 = vunpack.c.h.b16 %v93
  %v361 = vunpack.c.l.b16 %v94
  %v362 = vunpack.c.l.b16 %v95
  %v363 = vunpack.c.h.b16 %v95
  %v364 = vunpack.c.l.b16 %v96
  %v365 = vunpack.c.l.b16 %v97
  %v366 = vunpack.c.h.b16 %v97
  %v367 = vunpack.c.l.b16 %v98
  %v368 = vpack.c.b16 %v317, %v314
  %v369 = vpack.c.b16 %v318, %v315
  %v370 = vpack.c.b16 %v319, %v316
  %v371 = vpack.c.b16 %v323, %v320
  %v372 = vpack.c.b16 %v324, %v321
  %v373 = vpack.c.b16 %v325, %v322
  %v374 = vpack.c.b16 %v329, %v326
  %v375 = vpack.c.b16 %v330, %v327
  %v376 = vpack.c.b16 %v331, %v328
  %v377 = vpack.c.b16 %v335, %v332
  %v378 = vpack.c.b16 %v336, %v333
  %v379 = vpack.c.b16 %v337, %v334
  %v380 = vpack.c.b16 %v341, %v338
  %v381 = vpack.c.b16 %v342, %v339
  %v382 = vpack.c.b16 %v343, %v340
  %v383 = vpack.c.b16 %v347, %v344
  %v384 = vpack.c.b16 %v348, %v345
  %v385 = vpack.c.b16 %v349, %v346
  %v386 = vpack.c.b16 %v353, %v350
  %v387 = vpack.c.b16 %v354, %v351
  %v388 = vpack.c.b16 %v355, %v352
  %v389 = vpack.c.b16 %v359, %v356
  %v390 = vpack.c.b16 %v360, %v357
  %v391 = vpack.c.b16 %v361, %v358
  %v392 = vpack.c.b16 %v365, %v362
  %v393 = vpack.c.b16 %v366, %v363
  %v394 = vpack.c.b16 %v367, %v364
  %vm422 = vcmask 130048
  %v424 = vsel %vm422, %v225, 0
  %v427 = vsel %vm422, %v227, 0
  %v430 = vsel %vm422, %v229, 0
  %v433 = vsel %vm422, %v231, 0
  %v436 = vsel %vm422, %v233, 0
  %v439 = vsel %vm422, %v235, 0
  %v442 = vsel %vm422, %v237, 0
  %v445 = vsel %vm422, %v239, 0
  %v448 = vsel %vm422, %v241, 0
  %v451 = vsel %vm422, %v243, 0
  %v454 = vsel %vm422, %v245, 0
  %v457 = vsel %vm422, %v247, 0
  %v460 = vsel %vm422, %v249, 0
  %v463 = vsel %vm422, %v251, 0
  %v466 = vsel %vm422, %v253, 0
  %v469 = vsel %vm422, %v255, 0
  %v472 = vsel %vm422, %v257, 0
  %v475 = vsel %vm422, %v259, 0
  %477 = vmatprep.subr.bf16.mxu0 %v369
  %478 = vmatpush1.bf16.msra.mxu0 %v368
  %479 = vmatprep.subr.bf16.mxu0 %v372
  %480 = vmatpush1.bf16.msra.mxu0 %v371
  %481 = vmatprep.subr.bf16.mxu0 %v375
  %482 = vmatpush1.bf16.msra.mxu0 %v374
  %483 = vmatprep.subr.bf16.mxu0 %v378
  %484 = vmatpush1.bf16.msra.mxu0 %v377
  %485 = vmatprep.subr.bf16.mxu0 %v381
  %486 = vmatpush1.bf16.msra.mxu0 %v380
  %487 = vmatprep.subr.bf16.mxu0 %v384
  %488 = vmatpush1.bf16.msra.mxu0 %v383
  %489 = vmatprep.subr.bf16.mxu0 %v387
  %490 = vmatpush1.bf16.msra.mxu0 %v386
  %491 = vmatprep.subr.bf16.mxu0 %v390
  %492 = vmatpush1.bf16.msra.mxu0 %v389
  %493 = vmatprep.subr.bf16.mxu0 %v393
  %494 = vmatpush1.bf16.msra.mxu0 %v392
  %495 = vmatprep.subr.bf16.mxu0 0
  %496 = vmatpush1.bf16.msra.mxu0 0
  %497 = vmatprep.subr.bf16.mxu0 0
  %498 = vmatpush1.bf16.msra.mxu0 0
  %499 = vmatprep.subr.bf16.mxu0 0
  %500 = vmatpush1.bf16.msra.mxu0 0
  %501 = vmatprep.subr.bf16.mxu0 0
  %502 = vmatpush1.bf16.msra.mxu0 0
  %503 = vmatprep.subr.bf16.mxu0 0
  %504 = vmatpush1.bf16.msra.mxu0 0
  %505 = vmatprep.subr.bf16.mxu0 0
  %506 = vmatpush1.bf16.msra.mxu0 0
  %507 = vmatprep.subr.bf16.mxu0 0
  %508 = vmatpush1.bf16.msra.mxu0 0
  %509 = vmatprep.mubr.bf16.mxu0 %v424
  %510 = vmatmul.mubr.bf16.gmra.mrb[0].mxu0 %v224
  %v511 = vpop.f32.mrb[0].mxu0
  %v512 = vadd.f32 %v104, %v511
  %v513 = vpop.f32.mrb[0].mxu0
  %v514 = vadd.f32 %v108, %v513
  %v515 = vpop.f32.mrb[0].mxu0
  %v516 = vadd.f32 %v104, %v515
  %v517 = vpop.f32.mrb[0].mxu0
  %v518 = vadd.f32 %v108, %v517
  %519 = vmatprep.mubr.bf16.mxu0 %v427
  %520 = vmatmul.mubr.bf16.gmra.mrb[0].mxu0 %v226
  %v521 = vpop.f32.mrb[0].mxu0
  %v522 = vadd.f32 %v104, %v521
  %v523 = vpop.f32.mrb[0].mxu0
  %v524 = vadd.f32 %v108, %v523
  %v525 = vpop.f32.mrb[0].mxu0
  %v526 = vadd.f32 %v104, %v525
  %v527 = vpop.f32.mrb[0].mxu0
  %v528 = vadd.f32 %v108, %v527
  %529 = vmatprep.mubr.bf16.mxu0 %v430
  %530 = vmatmul.mubr.bf16.gmra.mrb[0].mxu0 %v228
  %v531 = vpop.f32.mrb[0].mxu0
  %v532 = vadd.f32 %v104, %v531
  %v533 = vpop.f32.mrb[0].mxu0
  %v534 = vadd.f32 %v108, %v533
  %v535 = vpop.f32.mrb[0].mxu0
  %v536 = vadd.f32 %v104, %v535
  %v537 = vpop.f32.mrb[0].mxu0
  %v538 = vadd.f32 %v108, %v537
  %539 = vmatprep.mubr.bf16.mxu0 %v433
  %540 = vmatmul.mubr.bf16.gmra.mrb[0].mxu0 %v230
  %v541 = vpop.f32.mrb[0].mxu0
  %v542 = vadd.f32 %v104, %v541
  %v543 = vpop.f32.mrb[0].mxu0
  %v544 = vadd.f32 %v108, %v543
  %v545 = vpop.f32.mrb[0].mxu0
  %v546 = vadd.f32 %v104, %v545
  %v547 = vpop.f32.mrb[0].mxu0
  %v548 = vadd.f32 %v108, %v547
  %549 = vmatprep.mubr.bf16.mxu0 %v436
  %550 = vmatmul.mubr.bf16.gmra.mrb[0].mxu0 %v232
  %v551 = vpop.f32.mrb[0].mxu0
  %v552 = vadd.f32 %v104, %v551
  %v553 = vpop.f32.mrb[0].mxu0
  %v554 = vadd.f32 %v108, %v553
  %v555 = vpop.f32.mrb[0].mxu0
  %v556 = vadd.f32 %v104, %v555
  %v557 = vpop.f32.mrb[0].mxu0
  %v558 = vadd.f32 %v108, %v557
  %559 = vmatprep.mubr.bf16.mxu0 %v439
  %560 = vmatmul.mubr.bf16.gmra.mrb[0].mxu0 %v234
  %v561 = vpop.f32.mrb[0].mxu0
  %v562 = vadd.f32 %v104, %v561
  %v563 = vpop.f32.mrb[0].mxu0
  %v564 = vadd.f32 %v108, %v563
  %v565 = vpop.f32.mrb[0].mxu0
  %v566 = vadd.f32 %v104, %v565
  %v567 = vpop.f32.mrb[0].mxu0
  %v568 = vadd.f32 %v108, %v567
  %569 = vmatprep.mubr.bf16.mxu0 %v442
  %570 = vmatmul.mubr.bf16.gmra.mrb[0].mxu0 %v236
  %v571 = vpop.f32.mrb[0].mxu0
  %v572 = vadd.f32 %v104, %v571
  %v573 = vpop.f32.mrb[0].mxu0
  %v574 = vadd.f32 %v108, %v573
  %v575 = vpop.f32.mrb[0].mxu0
  %v576 = vadd.f32 %v104, %v575
  %v577 = vpop.f32.mrb[0].mxu0
  %v578 = vadd.f32 %v108, %v577
  %579 = vmatprep.mubr.bf16.mxu0 %v445
  %580 = vmatmul.mubr.bf16.gmra.mrb[0].mxu0 %v238
  %v581 = vpop.f32.mrb[0].mxu0
  %v582 = vadd.f32 %v104, %v581
  %v583 = vpop.f32.mrb[0].mxu0
  %v584 = vadd.f32 %v108, %v583
  %v585 = vpop.f32.mrb[0].mxu0
  %v586 = vadd.f32 %v104, %v585
  %v587 = vpop.f32.mrb[0].mxu0
  %v588 = vadd.f32 %v108, %v587
  %589 = vmatprep.mubr.bf16.mxu0 %v448
  %590 = vmatmul.mubr.bf16.gmra.mrb[0].mxu0 %v240
  %v591 = vpop.f32.mrb[0].mxu0
  %v592 = vadd.f32 %v104, %v591
  %v593 = vpop.f32.mrb[0].mxu0
  %v594 = vadd.f32 %v108, %v593
  %v595 = vpop.f32.mrb[0].mxu0
  %v596 = vadd.f32 %v104, %v595
  %v597 = vpop.f32.mrb[0].mxu0
  %v598 = vadd.f32 %v108, %v597
  %599 = vmatprep.mubr.bf16.mxu0 %v451
  %600 = vmatmul.mubr.bf16.gmra.mrb[0].mxu0 %v242
  %v601 = vpop.f32.mrb[0].mxu0
  %v602 = vadd.f32 %v104, %v601
  %v603 = vpop.f32.mrb[0].mxu0
  %v604 = vadd.f32 %v108, %v603
  %v605 = vpop.f32.mrb[0].mxu0
  %v606 = vadd.f32 %v104, %v605
  %v607 = vpop.f32.mrb[0].mxu0
  %v608 = vadd.f32 %v108, %v607
  %609 = vmatprep.mubr.bf16.mxu0 %v454
  %610 = vmatmul.mubr.bf16.gmra.mrb[0].mxu0 %v244
  %v611 = vpop.f32.mrb[0].mxu0
  %v612 = vadd.f32 %v104, %v611
  %v613 = vpop.f32.mrb[0].mxu0
  %v614 = vadd.f32 %v108, %v613
  %v615 = vpop.f32.mrb[0].mxu0
  %v616 = vadd.f32 %v104, %v615
  %v617 = vpop.f32.mrb[0].mxu0
  %v618 = vadd.f32 %v108, %v617
  %619 = vmatprep.mubr.bf16.mxu0 %v457
  %620 = vmatmul.mubr.bf16.gmra.mrb[0].mxu0 %v246
  %v621 = vpop.f32.mrb[0].mxu0
  %v622 = vadd.f32 %v104, %v621
  %v623 = vpop.f32.mrb[0].mxu0
  %v624 = vadd.f32 %v108, %v623
  %v625 = vpop.f32.mrb[0].mxu0
  %v626 = vadd.f32 %v104, %v625
  %v627 = vpop.f32.mrb[0].mxu0
  %v628 = vadd.f32 %v108, %v627
  %629 = vmatprep.mubr.bf16.mxu0 %v460
  %630 = vmatmul.mubr.bf16.gmra.mrb[0].mxu0 %v248
  %v631 = vpop.f32.mrb[0].mxu0
  %v632 = vadd.f32 %v104, %v631
  %v633 = vpop.f32.mrb[0].mxu0
  %v634 = vadd.f32 %v108, %v633
  %v635 = vpop.f32.mrb[0].mxu0
  %v636 = vadd.f32 %v104, %v635
  %v637 = vpop.f32.mrb[0].mxu0
  %v638 = vadd.f32 %v108, %v637
  %639 = vmatprep.mubr.bf16.mxu0 %v463
  %640 = vmatmul.mubr.bf16.gmra.mrb[0].mxu0 %v250
  %v641 = vpop.f32.mrb[0].mxu0
  %v642 = vadd.f32 %v104, %v641
  %v643 = vpop.f32.mrb[0].mxu0
  %v644 = vadd.f32 %v108, %v643
  %v645 = vpop.f32.mrb[0].mxu0
  %v646 = vadd.f32 %v104, %v645
  %v647 = vpop.f32.mrb[0].mxu0
  %v648 = vadd.f32 %v108, %v647
  %649 = vmatprep.mubr.bf16.mxu0 %v466
  %650 = vmatmul.mubr.bf16.gmra.mrb[0].mxu0 %v252
  %v651 = vpop.f32.mrb[0].mxu0
  %v652 = vadd.f32 %v104, %v651
  %v653 = vpop.f32.mrb[0].mxu0
  %v654 = vadd.f32 %v108, %v653
  %v655 = vpop.f32.mrb[0].mxu0
  %v656 = vadd.f32 %v104, %v655
  %v657 = vpop.f32.mrb[0].mxu0
  %v658 = vadd.f32 %v108, %v657
  %659 = vmatprep.mubr.bf16.mxu0 %v469
  %660 = vmatmul.mubr.bf16.gmra.mrb[0].mxu0 %v254
  %v661 = vpop.f32.mrb[0].mxu0
  %v662 = vadd.f32 %v104, %v661
  %v663 = vpop.f32.mrb[0].mxu0
  %v664 = vadd.f32 %v108, %v663
  %v665 = vpop.f32.mrb[0].mxu0
  %v666 = vadd.f32 %v104, %v665
  %v667 = vpop.f32.mrb[0].mxu0
  %v668 = vadd.f32 %v108, %v667
  %669 = vmatprep.mubr.bf16.mxu0 %v472
  %670 = vmatmul.mubr.bf16.gmra.mrb[0].mxu0 %v256
  %v671 = vpop.f32.mrb[0].mxu0
  %v672 = vadd.f32 %v104, %v671
  %v673 = vpop.f32.mrb[0].mxu0
  %v674 = vadd.f32 %v108, %v673
  %v675 = vpop.f32.mrb[0].mxu0
  %v676 = vadd.f32 %v104, %v675
  %v677 = vpop.f32.mrb[0].mxu0
  %v678 = vadd.f32 %v108, %v677
  %679 = vmatprep.mubr.bf16.mxu0 %v475
  %680 = vmatmul.mubr.bf16.gmra.mrb[0].mxu0 %v258
  %v681 = vpop.f32.mrb[0].mxu0
  %v682 = vadd.f32 %v104, %v681
  %v683 = vpop.f32.mrb[0].mxu0
  %v684 = vadd.f32 %v108, %v683
  %v685 = vpop.f32.mrb[0].mxu0
  %v686 = vadd.f32 %v104, %v685
  %v687 = vpop.f32.mrb[0].mxu0
  %v688 = vadd.f32 %v108, %v687
  %689 = vdwg.mxu0
  %690 = vmatprep.subr.bf16.mxu0 0
  %691 = vmatpush1.bf16.msra.mxu0 %v370
  %692 = vmatprep.subr.bf16.mxu0 0
  %693 = vmatpush1.bf16.msra.mxu0 %v373
  %694 = vmatprep.subr.bf16.mxu0 0
  %695 = vmatpush1.bf16.msra.mxu0 %v376
  %696 = vmatprep.subr.bf16.mxu0 0
  %697 = vmatpush1.bf16.msra.mxu0 %v379
  %698 = vmatprep.subr.bf16.mxu0 0
  %699 = vmatpush1.bf16.msra.mxu0 %v382
  %700 = vmatprep.subr.bf16.mxu0 0
  %701 = vmatpush1.bf16.msra.mxu0 %v385
  %702 = vmatprep.subr.bf16.mxu0 0
  %703 = vmatpush1.bf16.msra.mxu0 %v388
  %704 = vmatprep.subr.bf16.mxu0 0
  %705 = vmatpush1.bf16.msra.mxu0 %v391
  %706 = vmatprep.subr.bf16.mxu0 0
  %707 = vmatpush1.bf16.msra.mxu0 %v394
  %708 = vmatprep.subr.bf16.mxu0 0
  %709 = vmatpush1.bf16.msra.mxu0 0
  %710 = vmatprep.subr.bf16.mxu0 0
  %711 = vmatpush1.bf16.msra.mxu0 0
  %712 = vmatprep.subr.bf16.mxu0 0
  %713 = vmatpush1.bf16.msra.mxu0 0
  %714 = vmatprep.subr.bf16.mxu0 0
  %715 = vmatpush1.bf16.msra.mxu0 0
  %716 = vmatprep.subr.bf16.mxu0 0
  %717 = vmatpush1.bf16.msra.mxu0 0
  %718 = vmatprep.subr.bf16.mxu0 0
  %719 = vmatpush1.bf16.msra.mxu0 0
  %720 = vmatprep.subr.bf16.mxu0 0
  %721 = vmatpush1.bf16.msra.mxu0 0
  %722 = vmatprep.mubr.bf16.mxu0 %v424
  %723 = vmatmul.mubr.bf16.gmra.mrb[0].mxu0 %v224
  %v724 = vpop.f32.mrb[0].mxu0
  %v725 = vadd.f32 %v112, %v724
  %v726 = vpop.f32.mrb[0].mxu0
  %v727 = vpop.f32.mrb[0].mxu0
  %v728 = vadd.f32 %v112, %v727
  %v729 = vpop.f32.mrb[0].mxu0
  %730 = vmatprep.mubr.bf16.mxu0 %v427
  %731 = vmatmul.mubr.bf16.gmra.mrb[0].mxu0 %v226
  %v732 = vpop.f32.mrb[0].mxu0
  %v733 = vadd.f32 %v112, %v732
  %v734 = vpop.f32.mrb[0].mxu0
  %v735 = vpop.f32.mrb[0].mxu0
  %v736 = vadd.f32 %v112, %v735
  %v737 = vpop.f32.mrb[0].mxu0
  %738 = vmatprep.mubr.bf16.mxu0 %v430
  %739 = vmatmul.mubr.bf16.gmra.mrb[0].mxu0 %v228
  %v740 = vpop.f32.mrb[0].mxu0
  %v741 = vadd.f32 %v112, %v740
  %v742 = vpop.f32.mrb[0].mxu0
  %v743 = vpop.f32.mrb[0].mxu0
  %v744 = vadd.f32 %v112, %v743
  %v745 = vpop.f32.mrb[0].mxu0
  %746 = vmatprep.mubr.bf16.mxu0 %v433
  %747 = vmatmul.mubr.bf16.gmra.mrb[0].mxu0 %v230
  %v748 = vpop.f32.mrb[0].mxu0
  %v749 = vadd.f32 %v112, %v748
  %v750 = vpop.f32.mrb[0].mxu0
  %v751 = vpop.f32.mrb[0].mxu0
  %v752 = vadd.f32 %v112, %v751
  %v753 = vpop.f32.mrb[0].mxu0
  %754 = vmatprep.mubr.bf16.mxu0 %v436
  %755 = vmatmul.mubr.bf16.gmra.mrb[0].mxu0 %v232
  %v756 = vpop.f32.mrb[0].mxu0
  %v757 = vadd.f32 %v112, %v756
  %v758 = vpop.f32.mrb[0].mxu0
  %v759 = vpop.f32.mrb[0].mxu0
  %v760 = vadd.f32 %v112, %v759
  %v761 = vpop.f32.mrb[0].mxu0
  %762 = vmatprep.mubr.bf16.mxu0 %v439
  %763 = vmatmul.mubr.bf16.gmra.mrb[0].mxu0 %v234
  %v764 = vpop.f32.mrb[0].mxu0
  %v765 = vadd.f32 %v112, %v764
  %v766 = vpop.f32.mrb[0].mxu0
  %v767 = vpop.f32.mrb[0].mxu0
  %v768 = vadd.f32 %v112, %v767
  %v769 = vpop.f32.mrb[0].mxu0
  %770 = vmatprep.mubr.bf16.mxu0 %v442
  %771 = vmatmul.mubr.bf16.gmra.mrb[0].mxu0 %v236
  %v772 = vpop.f32.mrb[0].mxu0
  %v773 = vadd.f32 %v112, %v772
  %v774 = vpop.f32.mrb[0].mxu0
  %v775 = vpop.f32.mrb[0].mxu0
  %v776 = vadd.f32 %v112, %v775
  %v777 = vpop.f32.mrb[0].mxu0
  %778 = vmatprep.mubr.bf16.mxu0 %v445
  %779 = vmatmul.mubr.bf16.gmra.mrb[0].mxu0 %v238
  %v780 = vpop.f32.mrb[0].mxu0
  %v781 = vadd.f32 %v112, %v780
  %v782 = vpop.f32.mrb[0].mxu0
  %v783 = vpop.f32.mrb[0].mxu0
  %v784 = vadd.f32 %v112, %v783
  %v785 = vpop.f32.mrb[0].mxu0
  %786 = vmatprep.mubr.bf16.mxu0 %v448
  %787 = vmatmul.mubr.bf16.gmra.mrb[0].mxu0 %v240
  %v788 = vpop.f32.mrb[0].mxu0
  %v789 = vadd.f32 %v112, %v788
  %v790 = vpop.f32.mrb[0].mxu0
  %v791 = vpop.f32.mrb[0].mxu0
  %v792 = vadd.f32 %v112, %v791
  %v793 = vpop.f32.mrb[0].mxu0
  %794 = vmatprep.mubr.bf16.mxu0 %v451
  %795 = vmatmul.mubr.bf16.gmra.mrb[0].mxu0 %v242
  %v796 = vpop.f32.mrb[0].mxu0
  %v797 = vadd.f32 %v112, %v796
  %v798 = vpop.f32.mrb[0].mxu0
  %v799 = vpop.f32.mrb[0].mxu0
  %v800 = vadd.f32 %v112, %v799
  %v801 = vpop.f32.mrb[0].mxu0
  %802 = vmatprep.mubr.bf16.mxu0 %v454
  %803 = vmatmul.mubr.bf16.gmra.mrb[0].mxu0 %v244
  %v804 = vpop.f32.mrb[0].mxu0
  %v805 = vadd.f32 %v112, %v804
  %v806 = vpop.f32.mrb[0].mxu0
  %v807 = vpop.f32.mrb[0].mxu0
  %v808 = vadd.f32 %v112, %v807
  %v809 = vpop.f32.mrb[0].mxu0
  %810 = vmatprep.mubr.bf16.mxu0 %v457
  %811 = vmatmul.mubr.bf16.gmra.mrb[0].mxu0 %v246
  %v812 = vpop.f32.mrb[0].mxu0
  %v813 = vadd.f32 %v112, %v812
  %v814 = vpop.f32.mrb[0].mxu0
  %v815 = vpop.f32.mrb[0].mxu0
  %v816 = vadd.f32 %v112, %v815
  %v817 = vpop.f32.mrb[0].mxu0
  %818 = vmatprep.mubr.bf16.mxu0 %v460
  %819 = vmatmul.mubr.bf16.gmra.mrb[0].mxu0 %v248
  %v820 = vpop.f32.mrb[0].mxu0
  %v821 = vadd.f32 %v112, %v820
  %v822 = vpop.f32.mrb[0].mxu0
  %v823 = vpop.f32.mrb[0].mxu0
  %v824 = vadd.f32 %v112, %v823
  %v825 = vpop.f32.mrb[0].mxu0
  %826 = vmatprep.mubr.bf16.mxu0 %v463
  %827 = vmatmul.mubr.bf16.gmra.mrb[0].mxu0 %v250
  %v828 = vpop.f32.mrb[0].mxu0
  %v829 = vadd.f32 %v112, %v828
  %v830 = vpop.f32.mrb[0].mxu0
  %v831 = vpop.f32.mrb[0].mxu0
  %v832 = vadd.f32 %v112, %v831
  %v833 = vpop.f32.mrb[0].mxu0
  %834 = vmatprep.mubr.bf16.mxu0 %v466
  %835 = vmatmul.mubr.bf16.gmra.mrb[0].mxu0 %v252
  %v836 = vpop.f32.mrb[0].mxu0
  %v837 = vadd.f32 %v112, %v836
  %v838 = vpop.f32.mrb[0].mxu0
  %v839 = vpop.f32.mrb[0].mxu0
  %v840 = vadd.f32 %v112, %v839
  %v841 = vpop.f32.mrb[0].mxu0
  %842 = vmatprep.mubr.bf16.mxu0 %v469
  %843 = vmatmul.mubr.bf16.gmra.mrb[0].mxu0 %v254
  %v844 = vpop.f32.mrb[0].mxu0
  %v845 = vadd.f32 %v112, %v844
  %v846 = vpop.f32.mrb[0].mxu0
  %v847 = vpop.f32.mrb[0].mxu0
  %v848 = vadd.f32 %v112, %v847
  %v849 = vpop.f32.mrb[0].mxu0
  %850 = vmatprep.mubr.bf16.mxu0 %v472
  %851 = vmatmul.mubr.bf16.gmra.mrb[0].mxu0 %v256
  %v852 = vpop.f32.mrb[0].mxu0
  %v853 = vadd.f32 %v112, %v852
  %v854 = vpop.f32.mrb[0].mxu0
  %v855 = vpop.f32.mrb[0].mxu0
  %v856 = vadd.f32 %v112, %v855
  %v857 = vpop.f32.mrb[0].mxu0
  %858 = vmatprep.mubr.bf16.mxu0 %v475
  %859 = vmatmul.mubr.bf16.gmra.mrb[0].mxu0 %v258
  %v860 = vpop.f32.mrb[0].mxu0
  %v861 = vadd.f32 %v112, %v860
  %v862 = vpop.f32.mrb[0].mxu0
  %v863 = vpop.f32.mrb[0].mxu0
  %v864 = vadd.f32 %v112, %v863
  %v865 = vpop.f32.mrb[0].mxu0
  %866 = vdwg.mxu0
  %v867 = vmax.f32 %v512, 0.0
  %v868 = vmax.f32 %v514, 0.0
  %v869 = vmax.f32 %v725, 0.0
  %v870 = vmax.f32 %v516, 0.0
  %v871 = vmax.f32 %v518, 0.0
  %v872 = vmax.f32 %v728, 0.0
  %v873 = vmax.f32 %v522, 0.0
  %v874 = vmax.f32 %v524, 0.0
  %v875 = vmax.f32 %v733, 0.0
  %v876 = vmax.f32 %v526, 0.0
  %v877 = vmax.f32 %v528, 0.0
  %v878 = vmax.f32 %v736, 0.0
  %v879 = vmax.f32 %v532, 0.0
  %v880 = vmax.f32 %v534, 0.0
  %v881 = vmax.f32 %v741, 0.0
  %v882 = vmax.f32 %v536, 0.0
  %v883 = vmax.f32 %v538, 0.0
  %v884 = vmax.f32 %v744, 0.0
  %v885 = vmax.f32 %v542, 0.0
  %v886 = vmax.f32 %v544, 0.0
  %v887 = vmax.f32 %v749, 0.0
  %v888 = vmax.f32 %v546, 0.0
  %v889 = vmax.f32 %v548, 0.0
  %v890 = vmax.f32 %v752, 0.0
  %v891 = vmax.f32 %v552, 0.0
  %v892 = vmax.f32 %v554, 0.0
  %v893 = vmax.f32 %v757, 0.0
  %v894 = vmax.f32 %v556, 0.0
  %v895 = vmax.f32 %v558, 0.0
  %v896 = vmax.f32 %v760, 0.0
  %v897 = vmax.f32 %v562, 0.0
  %v898 = vmax.f32 %v564, 0.0
  %v899 = vmax.f32 %v765, 0.0
  %v900 = vmax.f32 %v566, 0.0
  %v901 = vmax.f32 %v568, 0.0
  %v902 = vmax.f32 %v768, 0.0
  %v903 = vmax.f32 %v572, 0.0
  %v904 = vmax.f32 %v574, 0.0
  %v905 = vmax.f32 %v773, 0.0
  %v906 = vmax.f32 %v576, 0.0
  %v907 = vmax.f32 %v578, 0.0
  %v908 = vmax.f32 %v776, 0.0
  %v909 = vmax.f32 %v582, 0.0
  %v910 = vmax.f32 %v584, 0.0
  %v911 = vmax.f32 %v781, 0.0
  %v912 = vmax.f32 %v586, 0.0
  %v913 = vmax.f32 %v588, 0.0
  %v914 = vmax.f32 %v784, 0.0
  %v915 = vmax.f32 %v592, 0.0
  %v916 = vmax.f32 %v594, 0.0
  %v917 = vmax.f32 %v789, 0.0
  %v918 = vmax.f32 %v596, 0.0
  %v919 = vmax.f32 %v598, 0.0
  %v920 = vmax.f32 %v792, 0.0
  %v921 = vmax.f32 %v602, 0.0
  %v922 = vmax.f32 %v604, 0.0
  %v923 = vmax.f32 %v797, 0.0
  %v924 = vmax.f32 %v606, 0.0
  %v925 = vmax.f32 %v608, 0.0
  %v926 = vmax.f32 %v800, 0.0
  %v927 = vmax.f32 %v612, 0.0
  %v928 = vmax.f32 %v614, 0.0
  %v929 = vmax.f32 %v805, 0.0
  %v930 = vmax.f32 %v616, 0.0
  %v931 = vmax.f32 %v618, 0.0
  %v932 = vmax.f32 %v808, 0.0
  %v933 = vmax.f32 %v622, 0.0
  %v934 = vmax.f32 %v624, 0.0
  %v935 = vmax.f32 %v813, 0.0
  %v936 = vmax.f32 %v626, 0.0
  %v937 = vmax.f32 %v628, 0.0
  %v938 = vmax.f32 %v816, 0.0
  %v939 = vmax.f32 %v632, 0.0
  %v940 = vmax.f32 %v634, 0.0
  %v941 = vmax.f32 %v821, 0.0
  %v942 = vmax.f32 %v636, 0.0
  %v943 = vmax.f32 %v638, 0.0
  %v944 = vmax.f32 %v824, 0.0
  %v945 = vmax.f32 %v642, 0.0
  %v946 = vmax.f32 %v644, 0.0
  %v947 = vmax.f32 %v829, 0.0
  %v948 = vmax.f32 %v646, 0.0
  %v949 = vmax.f32 %v648, 0.0
  %v950 = vmax.f32 %v832, 0.0
  %v951 = vmax.f32 %v652, 0.0
  %v952 = vmax.f32 %v654, 0.0
  %v953 = vmax.f32 %v837, 0.0
  %v954 = vmax.f32 %v656, 0.0
  %v955 = vmax.f32 %v658, 0.0
  %v956 = vmax.f32 %v840, 0.0
  %v957 = vmax.f32 %v662, 0.0
  %v958 = vmax.f32 %v664, 0.0
  %v959 = vmax.f32 %v845, 0.0
  %v960 = vmax.f32 %v666, 0.0
  %v961 = vmax.f32 %v668, 0.0
  %v962 = vmax.f32 %v848, 0.0
  %v963 = vmax.f32 %v672, 0.0
  %v964 = vmax.f32 %v674, 0.0
  %v965 = vmax.f32 %v853, 0.0
  %v966 = vmax.f32 %v676, 0.0
  %v967 = vmax.f32 %v678, 0.0
  %v968 = vmax.f32 %v856, 0.0
  %v969 = vmax.f32 %v682, 0.0
  %v970 = vmax.f32 %v684, 0.0
  %v971 = vmax.f32 %v861, 0.0
  %v972 = vmax.f32 %v686, 0.0
  %v973 = vmax.f32 %v688, 0.0
  %v974 = vmax.f32 %v864, 0.0
  %v975 = vpack.c.bf16 %v870, %v867
  %v976 = vpack.c.bf16 %v871, %v868
  %v977 = vpack.c.bf16 %v872, %v869
  %v978 = vpack.c.bf16 %v876, %v873
  %v979 = vpack.c.bf16 %v877, %v874
  %v980 = vpack.c.bf16 %v878, %v875
  %v981 = vpack.c.bf16 %v882, %v879
  %v982 = vpack.c.bf16 %v883, %v880
  %v983 = vpack.c.bf16 %v884, %v881
  %v984 = vpack.c.bf16 %v888, %v885
  %v985 = vpack.c.bf16 %v889, %v886
  %v986 = vpack.c.bf16 %v890, %v887
  %v987 = vpack.c.bf16 %v894, %v891
  %v988 = vpack.c.bf16 %v895, %v892
  %v989 = vpack.c.bf16 %v896, %v893
  %v990 = vpack.c.bf16 %v900, %v897
  %v991 = vpack.c.bf16 %v901, %v898
  %v992 = vpack.c.bf16 %v902, %v899
  %v993 = vpack.c.bf16 %v906, %v903
  %v994 = vpack.c.bf16 %v907, %v904
  %v995 = vpack.c.bf16 %v908, %v905
  %v996 = vpack.c.bf16 %v912, %v909
  %v997 = vpack.c.bf16 %v913, %v910
  %v998 = vpack.c.bf16 %v914, %v911
  %v999 = vpack.c.bf16 %v918, %v915
  %v1000 = vpack.c.bf16 %v919, %v916
  %v1001 = vpack.c.bf16 %v920, %v917
  %v1002 = vpack.c.bf16 %v924, %v921
  %v1003 = vpack.c.bf16 %v925, %v922
  %v1004 = vpack.c.bf16 %v926, %v923
  %v1005 = vpack.c.bf16 %v930, %v927
  %v1006 = vpack.c.bf16 %v931, %v928
  %v1007 = vpack.c.bf16 %v932, %v929
  %v1008 = vpack.c.bf16 %v936, %v933
  %v1009 = vpack.c.bf16 %v937, %v934
  %v1010 = vpack.c.bf16 %v938, %v935
  %v1011 = vpack.c.bf16 %v942, %v939
  %v1012 = vpack.c.bf16 %v943, %v940
  %v1013 = vpack.c.bf16 %v944, %v941
  %v1014 = vpack.c.bf16 %v948, %v945
  %v1015 = vpack.c.bf16 %v949, %v946
  %v1016 = vpack.c.bf16 %v950, %v947
  %v1017 = vpack.c.bf16 %v954, %v951
  %v1018 = vpack.c.bf16 %v955, %v952
  %v1019 = vpack.c.bf16 %v956, %v953
  %v1020 = vpack.c.bf16 %v960, %v957
  %v1021 = vpack.c.bf16 %v961, %v958
  %v1022 = vpack.c.bf16 %v962, %v959
  %v1023 = vpack.c.bf16 %v966, %v963
  %v1024 = vpack.c.bf16 %v967, %v964
  %v1025 = vpack.c.bf16 %v968, %v965
  %v1026 = vpack.c.bf16 %v972, %v969
  %v1027 = vpack.c.bf16 %v973, %v970
  %v1028 = vpack.c.bf16 %v974, %v971
  %v1029 = vld [vmem:[%s3] sm:$0xf]
  %v1030 = vld [vmem:[%s3 + $0x4] sm:$0xf]
  %v1031 = vld [vmem:[%s3 + $0x8] sm:$0xf]
  %v1032 = vld [vmem:[%s3 + $0xc] sm:$0xf]
  %v1033 = vld [vmem:[%s3 + $0x10] sm:$0xf]
  %v1034 = vld [vmem:[%s3 + $0x14] sm:$0xf]
  %v1035 = vld [vmem:[%s3 + $0x18] sm:$0xf]
  %v1036 = vld [vmem:[%s3 + $0x1c] sm:$0xf]
  %v1037 = vld [vmem:[%s3 + $0x20] sm:$0xf]
  %v1038 = vld [vmem:[%s3 + $0x24] sm:$0xf]
  %v1039 = vld [vmem:[%s3 + $0x28] sm:$0xf]
  %v1040 = vld [vmem:[%s3 + $0x2c] sm:$0xf]
  %v1041 = vld [vmem:[%s3 + $0x30] sm:$0xf]
  %v1042 = vld [vmem:[%s3 + $0x34] sm:$0xf]
  %v1043 = vld [vmem:[%s3 + $0x38] sm:$0xf]
  %v1044 = vld [vmem:[%s3 + $0x3c] sm:$0xf]
  %v1045 = vld [vmem:[%s3 + $0x40] sm:$0xf]
  %v1046 = vld [vmem:[%s3 + $0x44] sm:$0xf]
  %v1047 = vld [vmem:[%s3 + $0x48] sm:$0xf]
  %v1048 = vld [vmem:[%s3 + $0x4c] sm:$0xf]
  %v1049 = vld [vmem:[%s3 + $0x50] sm:$0xf]
  %v1050 = vld [vmem:[%s3 + $0x54] sm:$0xf]
  %v1051 = vld [vmem:[%s3 + $0x58] sm:$0xf]
  %v1052 = vld [vmem:[%s3 + $0x5c] sm:$0xf]
  %v1053 = vld [vmem:[%s3 + $0x60] sm:$0xf]
  %v1054 = vld [vmem:[%s3 + $0x64] sm:$0xf]
  %v1055 = vld [vmem:[%s3 + $0x68] sm:$0xf]
  %v1056 = vld [vmem:[%s3 + $0x6c] sm:$0xf]
  %v1057 = vld [vmem:[%s3 + $0x70] sm:$0xf]
  %v1058 = vld [vmem:[%s3 + $0x74] sm:$0xf]
  %v1059 = vld [vmem:[%s3 + $0x78] sm:$0xf]
  %v1060 = vld [vmem:[%s3 + $0x7c] sm:$0xf]
  %v1061 = vld [vmem:[%s3 + $0x80] sm:$0xf]
  %v1062 = vld [vmem:[%s3 + $0x84] sm:$0xf]
  %v1063 = vld [vmem:[%s3 + $0x88] sm:$0xf]
  %v1064 = vld [vmem:[%s3 + $0x8c] sm:$0xf]
  %v1065 = vld [vmem:[%s4] sm:$0x1]
  %v1067 = vlaneseq
  %v1068 = vshrl.u32 %v1067, 7
  %v1069 = vsub.s32 0, %v1068
  %v1070 = vrot.slane %v1065, %v1069
  %v1108 = vunpack.c.l.b16 %v1029
  %v1109 = vunpack.c.l.b16 %v1030
  %v1110 = vunpack.c.l.b16 %v1031
  %v1111 = vunpack.c.l.b16 %v1032
  %v1112 = vunpack.c.l.b16 %v1033
  %v1113 = vunpack.c.l.b16 %v1034
  %v1114 = vunpack.c.l.b16 %v1035
  %v1115 = vunpack.c.l.b16 %v1036
  %v1116 = vunpack.c.l.b16 %v1037
  %v1117 = vunpack.c.l.b16 %v1038
  %v1118 = vunpack.c.l.b16 %v1039
  %v1119 = vunpack.c.l.b16 %v1040
  %v1120 = vunpack.c.l.b16 %v1041
  %v1121 = vunpack.c.l.b16 %v1042
  %v1122 = vunpack.c.l.b16 %v1043
  %v1123 = vunpack.c.l.b16 %v1044
  %v1124 = vunpack.c.l.b16 %v1045
  %v1125 = vunpack.c.l.b16 %v1046
  %v1126 = vunpack.c.l.b16 %v1047
  %v1127 = vunpack.c.l.b16 %v1048
  %v1128 = vunpack.c.l.b16 %v1049
  %v1129 = vunpack.c.l.b16 %v1050
  %v1130 = vunpack.c.l.b16 %v1051
  %v1131 = vunpack.c.l.b16 %v1052
  %v1132 = vunpack.c.l.b16 %v1053
  %v1133 = vunpack.c.l.b16 %v1054
  %v1134 = vunpack.c.l.b16 %v1055
  %v1135 = vunpack.c.l.b16 %v1056
  %v1136 = vunpack.c.l.b16 %v1057
  %v1137 = vunpack.c.l.b16 %v1058
  %v1138 = vunpack.c.l.b16 %v1059
  %v1139 = vunpack.c.l.b16 %v1060
  %v1140 = vunpack.c.l.b16 %v1061
  %v1141 = vunpack.c.l.b16 %v1062
  %v1142 = vunpack.c.l.b16 %v1063
  %v1143 = vunpack.c.l.b16 %v1064
  %v1144 = vpack.c.b16 %v1109, %v1108
  %v1145 = vpack.c.b16 %v1111, %v1110
  %v1146 = vpack.c.b16 %v1113, %v1112
  %v1147 = vpack.c.b16 %v1115, %v1114
  %v1148 = vpack.c.b16 %v1117, %v1116
  %v1149 = vpack.c.b16 %v1119, %v1118
  %v1150 = vpack.c.b16 %v1121, %v1120
  %v1151 = vpack.c.b16 %v1123, %v1122
  %v1152 = vpack.c.b16 %v1125, %v1124
  %v1153 = vpack.c.b16 %v1127, %v1126
  %v1154 = vpack.c.b16 %v1129, %v1128
  %v1155 = vpack.c.b16 %v1131, %v1130
  %v1156 = vpack.c.b16 %v1133, %v1132
  %v1157 = vpack.c.b16 %v1135, %v1134
  %v1158 = vpack.c.b16 %v1137, %v1136
  %v1159 = vpack.c.b16 %v1139, %v1138
  %v1160 = vpack.c.b16 %v1141, %v1140
  %v1161 = vpack.c.b16 %v1143, %v1142
  %vm1180 = vcmask 261120
  %v1182 = vsel %vm1180, %v977, 0
  %v1185 = vsel %vm1180, %v980, 0
  %v1188 = vsel %vm1180, %v983, 0
  %v1191 = vsel %vm1180, %v986, 0
  %v1194 = vsel %vm1180, %v989, 0
  %v1197 = vsel %vm1180, %v992, 0
  %v1200 = vsel %vm1180, %v995, 0
  %v1203 = vsel %vm1180, %v998, 0
  %v1206 = vsel %vm1180, %v1001, 0
  %v1209 = vsel %vm1180, %v1004, 0
  %v1212 = vsel %vm1180, %v1007, 0
  %v1215 = vsel %vm1180, %v1010, 0
  %v1218 = vsel %vm1180, %v1013, 0
  %v1221 = vsel %vm1180, %v1016, 0
  %v1224 = vsel %vm1180, %v1019, 0
  %v1227 = vsel %vm1180, %v1022, 0
  %v1230 = vsel %vm1180, %v1025, 0
  %v1233 = vsel %vm1180, %v1028, 0
  %1235 = vmatprep.subr.bf16.mxu0 0
  %1236 = vmatpush1.bf16.msra.mxu0 %v1144
  %1237 = vmatprep.subr.bf16.mxu0 0
  %1238 = vmatpush1.bf16.msra.mxu0 %v1145
  %1239 = vmatprep.subr.bf16.mxu0 0
  %1240 = vmatpush1.bf16.msra.mxu0 %v1146
  %1241 = vmatprep.subr.bf16.mxu0 0
  %1242 = vmatpush1.bf16.msra.mxu0 %v1147
  %1243 = vmatprep.subr.bf16.mxu0 0
  %1244 = vmatpush1.bf16.msra.mxu0 %v1148
  %1245 = vmatprep.subr.bf16.mxu0 0
  %1246 = vmatpush1.bf16.msra.mxu0 %v1149
  %1247 = vmatprep.subr.bf16.mxu0 0
  %1248 = vmatpush1.bf16.msra.mxu0 %v1150
  %1249 = vmatprep.subr.bf16.mxu0 0
  %1250 = vmatpush1.bf16.msra.mxu0 %v1151
  %1251 = vmatprep.subr.bf16.mxu0 0
  %1252 = vmatpush1.bf16.msra.mxu0 %v1152
  %1253 = vmatprep.subr.bf16.mxu0 0
  %1254 = vmatpush1.bf16.msra.mxu0 %v1153
  %1255 = vmatprep.subr.bf16.mxu0 0
  %1256 = vmatpush1.bf16.msra.mxu0 %v1154
  %1257 = vmatprep.subr.bf16.mxu0 0
  %1258 = vmatpush1.bf16.msra.mxu0 %v1155
  %1259 = vmatprep.subr.bf16.mxu0 0
  %1260 = vmatpush1.bf16.msra.mxu0 %v1156
  %1261 = vmatprep.subr.bf16.mxu0 0
  %1262 = vmatpush1.bf16.msra.mxu0 %v1157
  %1263 = vmatprep.subr.bf16.mxu0 0
  %1264 = vmatpush1.bf16.msra.mxu0 %v1158
  %1265 = vmatprep.subr.bf16.mxu0 0
  %1266 = vmatpush1.bf16.msra.mxu0 %v1159
  %1267 = vmatprep.mubr.bf16.mxu0 %v976
  %1268 = vmatmul.mubr.bf16.gmra.mrb[0].mxu0 %v975
  %v1269 = vpop.f32.mrb[0].mxu0
  %v1270 = vadd.f32 %v1070, %v1269
  %v1271 = vpop.f32.mrb[0].mxu0
  %v1272 = vpop.f32.mrb[0].mxu0
  %v1273 = vadd.f32 %v1070, %v1272
  %v1274 = vpop.f32.mrb[0].mxu0
  %1275 = vmatprep.mubr.bf16.mxu0 %v979
  %1276 = vmatmul.mubr.bf16.gmra.mrb[0].mxu0 %v978
  %v1277 = vpop.f32.mrb[0].mxu0
  %v1278 = vadd.f32 %v1070, %v1277
  %v1279 = vpop.f32.mrb[0].mxu0
  %v1280 = vpop.f32.mrb[0].mxu0
  %v1281 = vadd.f32 %v1070, %v1280
  %v1282 = vpop.f32.mrb[0].mxu0
  %1283 = vmatprep.mubr.bf16.mxu0 %v982
  %1284 = vmatmul.mubr.bf16.gmra.mrb[0].mxu0 %v981
  %v1285 = vpop.f32.mrb[0].mxu0
  %v1286 = vadd.f32 %v1070, %v1285
  %v1287 = vpop.f32.mrb[0].mxu0
  %v1288 = vpop.f32.mrb[0].mxu0
  %v1289 = vadd.f32 %v1070, %v1288
  %v1290 = vpop.f32.mrb[0].mxu0
  %1291 = vmatprep.mubr.bf16.mxu0 %v985
  %1292 = vmatmul.mubr.bf16.gmra.mrb[0].mxu0 %v984
  %v1293 = vpop.f32.mrb[0].mxu0
  %v1294 = vadd.f32 %v1070, %v1293
  %v1295 = vpop.f32.mrb[0].mxu0
  %v1296 = vpop.f32.mrb[0].mxu0
  %v1297 = vadd.f32 %v1070, %v1296
  %v1298 = vpop.f32.mrb[0].mxu0
  %1299 = vmatprep.mubr.bf16.mxu0 %v988
  %1300 = vmatmul.mubr.bf16.gmra.mrb[0].mxu0 %v987
  %v1301 = vpop.f32.mrb[0].mxu0
  %v1302 = vadd.f32 %v1070, %v1301
  %v1303 = vpop.f32.mrb[0].mxu0
  %v1304 = vpop.f32.mrb[0].mxu0
  %v1305 = vadd.f32 %v1070, %v1304
  %v1306 = vpop.f32.mrb[0].mxu0
  %1307 = vmatprep.mubr.bf16.mxu0 %v991
  %1308 = vmatmul.mubr.bf16.gmra.mrb[0].mxu0 %v990
  %v1309 = vpop.f32.mrb[0].mxu0
  %v1310 = vadd.f32 %v1070, %v1309
  %v1311 = vpop.f32.mrb[0].mxu0
  %v1312 = vpop.f32.mrb[0].mxu0
  %v1313 = vadd.f32 %v1070, %v1312
  %v1314 = vpop.f32.mrb[0].mxu0
  %1315 = vmatprep.mubr.bf16.mxu0 %v994
  %1316 = vmatmul.mubr.bf16.gmra.mrb[0].mxu0 %v993
  %v1317 = vpop.f32.mrb[0].mxu0
  %v1318 = vadd.f32 %v1070, %v1317
  %v1319 = vpop.f32.mrb[0].mxu0
  %v1320 = vpop.f32.mrb[0].mxu0
  %v1321 = vadd.f32 %v1070, %v1320
  %v1322 = vpop.f32.mrb[0].mxu0
  %1323 = vmatprep.mubr.bf16.mxu0 %v997
  %1324 = vmatmul.mubr.bf16.gmra.mrb[0].mxu0 %v996
  %v1325 = vpop.f32.mrb[0].mxu0
  %v1326 = vadd.f32 %v1070, %v1325
  %v1327 = vpop.f32.mrb[0].mxu0
  %v1328 = vpop.f32.mrb[0].mxu0
  %v1329 = vadd.f32 %v1070, %v1328
  %v1330 = vpop.f32.mrb[0].mxu0
  %1331 = vmatprep.mubr.bf16.mxu0 %v1000
  %1332 = vmatmul.mubr.bf16.gmra.mrb[0].mxu0 %v999
  %v1333 = vpop.f32.mrb[0].mxu0
  %v1334 = vadd.f32 %v1070, %v1333
  %v1335 = vpop.f32.mrb[0].mxu0
  %v1336 = vpop.f32.mrb[0].mxu0
  %v1337 = vadd.f32 %v1070, %v1336
  %v1338 = vpop.f32.mrb[0].mxu0
  %1339 = vmatprep.mubr.bf16.mxu0 %v1003
  %1340 = vmatmul.mubr.bf16.gmra.mrb[0].mxu0 %v1002
  %v1341 = vpop.f32.mrb[0].mxu0
  %v1342 = vadd.f32 %v1070, %v1341
  %v1343 = vpop.f32.mrb[0].mxu0
  %v1344 = vpop.f32.mrb[0].mxu0
  %v1345 = vadd.f32 %v1070, %v1344
  %v1346 = vpop.f32.mrb[0].mxu0
  %1347 = vmatprep.mubr.bf16.mxu0 %v1006
  %1348 = vmatmul.mubr.bf16.gmra.mrb[0].mxu0 %v1005
  %v1349 = vpop.f32.mrb[0].mxu0
  %v1350 = vadd.f32 %v1070, %v1349
  %v1351 = vpop.f32.mrb[0].mxu0
  %v1352 = vpop.f32.mrb[0].mxu0
  %v1353 = vadd.f32 %v1070, %v1352
  %v1354 = vpop.f32.mrb[0].mxu0
  %1355 = vmatprep.mubr.bf16.mxu0 %v1009
  %1356 = vmatmul.mubr.bf16.gmra.mrb[0].mxu0 %v1008
  %v1357 = vpop.f32.mrb[0].mxu0
  %v1358 = vadd.f32 %v1070, %v1357
  %v1359 = vpop.f32.mrb[0].mxu0
  %v1360 = vpop.f32.mrb[0].mxu0
  %v1361 = vadd.f32 %v1070, %v1360
  %v1362 = vpop.f32.mrb[0].mxu0
  %1363 = vmatprep.mubr.bf16.mxu0 %v1012
  %1364 = vmatmul.mubr.bf16.gmra.mrb[0].mxu0 %v1011
  %v1365 = vpop.f32.mrb[0].mxu0
  %v1366 = vadd.f32 %v1070, %v1365
  %v1367 = vpop.f32.mrb[0].mxu0
  %v1368 = vpop.f32.mrb[0].mxu0
  %v1369 = vadd.f32 %v1070, %v1368
  %v1370 = vpop.f32.mrb[0].mxu0
  %1371 = vmatprep.mubr.bf16.mxu0 %v1015
  %1372 = vmatmul.mubr.bf16.gmra.mrb[0].mxu0 %v1014
  %v1373 = vpop.f32.mrb[0].mxu0
  %v1374 = vadd.f32 %v1070, %v1373
  %v1375 = vpop.f32.mrb[0].mxu0
  %v1376 = vpop.f32.mrb[0].mxu0
  %v1377 = vadd.f32 %v1070, %v1376
  %v1378 = vpop.f32.mrb[0].mxu0
  %1379 = vmatprep.mubr.bf16.mxu0 %v1018
  %1380 = vmatmul.mubr.bf16.gmra.mrb[0].mxu0 %v1017
  %v1381 = vpop.f32.mrb[0].mxu0
  %v1382 = vadd.f32 %v1070, %v1381
  %v1383 = vpop.f32.mrb[0].mxu0
  %v1384 = vpop.f32.mrb[0].mxu0
  %v1385 = vadd.f32 %v1070, %v1384
  %v1386 = vpop.f32.mrb[0].mxu0
  %1387 = vmatprep.mubr.bf16.mxu0 %v1021
  %1388 = vmatmul.mubr.bf16.gmra.mrb[0].mxu0 %v1020
  %v1389 = vpop.f32.mrb[0].mxu0
  %v1390 = vadd.f32 %v1070, %v1389
  %v1391 = vpop.f32.mrb[0].mxu0
  %v1392 = vpop.f32.mrb[0].mxu0
  %v1393 = vadd.f32 %v1070, %v1392
  %v1394 = vpop.f32.mrb[0].mxu0
  %1395 = vmatprep.mubr.bf16.mxu0 %v1024
  %1396 = vmatmul.mubr.bf16.gmra.mrb[0].mxu0 %v1023
  %v1397 = vpop.f32.mrb[0].mxu0
  %v1398 = vadd.f32 %v1070, %v1397
  %v1399 = vpop.f32.mrb[0].mxu0
  %v1400 = vpop.f32.mrb[0].mxu0
  %v1401 = vadd.f32 %v1070, %v1400
  %v1402 = vpop.f32.mrb[0].mxu0
  %1403 = vmatprep.mubr.bf16.mxu0 %v1027
  %1404 = vmatmul.mubr.bf16.gmra.mrb[0].mxu0 %v1026
  %v1405 = vpop.f32.mrb[0].mxu0
  %v1406 = vadd.f32 %v1070, %v1405
  %v1407 = vpop.f32.mrb[0].mxu0
  %v1408 = vpop.f32.mrb[0].mxu0
  %v1409 = vadd.f32 %v1070, %v1408
  %v1410 = vpop.f32.mrb[0].mxu0
  %1411 = vdwg.mxu0
  %1412 = vmatprep.subr.bf16.mxu0 0
  %1413 = vmatpush1.bf16.msra.mxu0 %v1160
  %1414 = vmatprep.subr.bf16.mxu0 0
  %1415 = vmatpush1.bf16.msra.mxu0 %v1161
  %1416 = vmatprep.subr.bf16.mxu0 0
  %1417 = vmatpush1.bf16.msra.mxu0 0
  %1418 = vmatprep.subr.bf16.mxu0 0
  %1419 = vmatpush1.bf16.msra.mxu0 0
  %1420 = vmatprep.subr.bf16.mxu0 0
  %1421 = vmatpush1.bf16.msra.mxu0 0
  %1422 = vmatprep.subr.bf16.mxu0 0
  %1423 = vmatpush1.bf16.msra.mxu0 0
  %1424 = vmatprep.subr.bf16.mxu0 0
  %1425 = vmatpush1.bf16.msra.mxu0 0
  %1426 = vmatprep.subr.bf16.mxu0 0
  %1427 = vmatpush1.bf16.msra.mxu0 0
  %1428 = vmatprep.subr.bf16.mxu0 0
  %1429 = vmatpush1.bf16.msra.mxu0 0
  %1430 = vmatprep.subr.bf16.mxu0 0
  %1431 = vmatpush1.bf16.msra.mxu0 0
  %1432 = vmatprep.subr.bf16.mxu0 0
  %1433 = vmatpush1.bf16.msra.mxu0 0
  %1434 = vmatprep.subr.bf16.mxu0 0
  %1435 = vmatpush1.bf16.msra.mxu0 0
  %1436 = vmatprep.subr.bf16.mxu0 0
  %1437 = vmatpush1.bf16.msra.mxu0 0
  %1438 = vmatprep.subr.bf16.mxu0 0
  %1439 = vmatpush1.bf16.msra.mxu0 0
  %1440 = vmatprep.subr.bf16.mxu0 0
  %1441 = vmatpush1.bf16.msra.mxu0 0
  %1442 = vmatprep.subr.bf16.mxu0 0
  %1443 = vmatpush1.bf16.msra.mxu0 0
  %1444 = vmatprep.mubr.bf16.mxu0 0
  %1445 = vmatmul.mubr.bf16.gmra.mrb[0].mxu0 %v1182
  %v1446 = vpop.f32.mrb[0].mxu0
  %v1447 = vadd.f32 %v1270, %v1446
  %v1448 = vpop.f32.mrb[0].mxu0
  %v1449 = vpop.f32.mrb[0].mxu0
  %v1450 = vadd.f32 %v1273, %v1449
  %v1451 = vpop.f32.mrb[0].mxu0
  %1452 = vmatprep.mubr.bf16.mxu0 0
  %1453 = vmatmul.mubr.bf16.gmra.mrb[0].mxu0 %v1185
  %v1454 = vpop.f32.mrb[0].mxu0
  %v1455 = vadd.f32 %v1278, %v1454
  %v1456 = vpop.f32.mrb[0].mxu0
  %v1457 = vpop.f32.mrb[0].mxu0
  %v1458 = vadd.f32 %v1281, %v1457
  %v1459 = vpop.f32.mrb[0].mxu0
  %1460 = vmatprep.mubr.bf16.mxu0 0
  %1461 = vmatmul.mubr.bf16.gmra.mrb[0].mxu0 %v1188
  %v1462 = vpop.f32.mrb[0].mxu0
  %v1463 = vadd.f32 %v1286, %v1462
  %v1464 = vpop.f32.mrb[0].mxu0
  %v1465 = vpop.f32.mrb[0].mxu0
  %v1466 = vadd.f32 %v1289, %v1465
  %v1467 = vpop.f32.mrb[0].mxu0
  %1468 = vmatprep.mubr.bf16.mxu0 0
  %1469 = vmatmul.mubr.bf16.gmra.mrb[0].mxu0 %v1191
  %v1470 = vpop.f32.mrb[0].mxu0
  %v1471 = vadd.f32 %v1294, %v1470
  %v1472 = vpop.f32.mrb[0].mxu0
  %v1473 = vpop.f32.mrb[0].mxu0
  %v1474 = vadd.f32 %v1297, %v1473
  %v1475 = vpop.f32.mrb[0].mxu0
  %1476 = vmatprep.mubr.bf16.mxu0 0
  %1477 = vmatmul.mubr.bf16.gmra.mrb[0].mxu0 %v1194
  %v1478 = vpop.f32.mrb[0].mxu0
  %v1479 = vadd.f32 %v1302, %v1478
  %v1480 = vpop.f32.mrb[0].mxu0
  %v1481 = vpop.f32.mrb[0].mxu0
  %v1482 = vadd.f32 %v1305, %v1481
  %v1483 = vpop.f32.mrb[0].mxu0
  %1484 = vmatprep.mubr.bf16.mxu0 0
  %1485 = vmatmul.mubr.bf16.gmra.mrb[0].mxu0 %v1197
  %v1486 = vpop.f32.mrb[0].mxu0
  %v1487 = vadd.f32 %v1310, %v1486
  %v1488 = vpop.f32.mrb[0].mxu0
  %v1489 = vpop.f32.mrb[0].mxu0
  %v1490 = vadd.f32 %v1313, %v1489
  %v1491 = vpop.f32.mrb[0].mxu0
  %1492 = vmatprep.mubr.bf16.mxu0 0
  %1493 = vmatmul.mubr.bf16.gmra.mrb[0].mxu0 %v1200
  %v1494 = vpop.f32.mrb[0].mxu0
  %v1495 = vadd.f32 %v1318, %v1494
  %v1496 = vpop.f32.mrb[0].mxu0
  %v1497 = vpop.f32.mrb[0].mxu0
  %v1498 = vadd.f32 %v1321, %v1497
  %v1499 = vpop.f32.mrb[0].mxu0
  %1500 = vmatprep.mubr.bf16.mxu0 0
  %1501 = vmatmul.mubr.bf16.gmra.mrb[0].mxu0 %v1203
  %v1502 = vpop.f32.mrb[0].mxu0
  %v1503 = vadd.f32 %v1326, %v1502
  %v1504 = vpop.f32.mrb[0].mxu0
  %v1505 = vpop.f32.mrb[0].mxu0
  %v1506 = vadd.f32 %v1329, %v1505
  %v1507 = vpop.f32.mrb[0].mxu0
  %1508 = vmatprep.mubr.bf16.mxu0 0
  %1509 = vmatmul.mubr.bf16.gmra.mrb[0].mxu0 %v1206
  %v1510 = vpop.f32.mrb[0].mxu0
  %v1511 = vadd.f32 %v1334, %v1510
  %v1512 = vpop.f32.mrb[0].mxu0
  %v1513 = vpop.f32.mrb[0].mxu0
  %v1514 = vadd.f32 %v1337, %v1513
  %v1515 = vpop.f32.mrb[0].mxu0
  %1516 = vmatprep.mubr.bf16.mxu0 0
  %1517 = vmatmul.mubr.bf16.gmra.mrb[0].mxu0 %v1209
  %v1518 = vpop.f32.mrb[0].mxu0
  %v1519 = vadd.f32 %v1342, %v1518
  %v1520 = vpop.f32.mrb[0].mxu0
  %v1521 = vpop.f32.mrb[0].mxu0
  %v1522 = vadd.f32 %v1345, %v1521
  %v1523 = vpop.f32.mrb[0].mxu0
  %1524 = vmatprep.mubr.bf16.mxu0 0
  %1525 = vmatmul.mubr.bf16.gmra.mrb[0].mxu0 %v1212
  %v1526 = vpop.f32.mrb[0].mxu0
  %v1527 = vadd.f32 %v1350, %v1526
  %v1528 = vpop.f32.mrb[0].mxu0
  %v1529 = vpop.f32.mrb[0].mxu0
  %v1530 = vadd.f32 %v1353, %v1529
  %v1531 = vpop.f32.mrb[0].mxu0
  %1532 = vmatprep.mubr.bf16.mxu0 0
  %1533 = vmatmul.mubr.bf16.gmra.mrb[0].mxu0 %v1215
  %v1534 = vpop.f32.mrb[0].mxu0
  %v1535 = vadd.f32 %v1358, %v1534
  %v1536 = vpop.f32.mrb[0].mxu0
  %v1537 = vpop.f32.mrb[0].mxu0
  %v1538 = vadd.f32 %v1361, %v1537
  %v1539 = vpop.f32.mrb[0].mxu0
  %1540 = vmatprep.mubr.bf16.mxu0 0
  %1541 = vmatmul.mubr.bf16.gmra.mrb[0].mxu0 %v1218
  %v1542 = vpop.f32.mrb[0].mxu0
  %v1543 = vadd.f32 %v1366, %v1542
  %v1544 = vpop.f32.mrb[0].mxu0
  %v1545 = vpop.f32.mrb[0].mxu0
  %v1546 = vadd.f32 %v1369, %v1545
  %v1547 = vpop.f32.mrb[0].mxu0
  %1548 = vmatprep.mubr.bf16.mxu0 0
  %1549 = vmatmul.mubr.bf16.gmra.mrb[0].mxu0 %v1221
  %v1550 = vpop.f32.mrb[0].mxu0
  %v1551 = vadd.f32 %v1374, %v1550
  %v1552 = vpop.f32.mrb[0].mxu0
  %v1553 = vpop.f32.mrb[0].mxu0
  %v1554 = vadd.f32 %v1377, %v1553
  %v1555 = vpop.f32.mrb[0].mxu0
  %1556 = vmatprep.mubr.bf16.mxu0 0
  %1557 = vmatmul.mubr.bf16.gmra.mrb[0].mxu0 %v1224
  %v1558 = vpop.f32.mrb[0].mxu0
  %v1559 = vadd.f32 %v1382, %v1558
  %v1560 = vpop.f32.mrb[0].mxu0
  %v1561 = vpop.f32.mrb[0].mxu0
  %v1562 = vadd.f32 %v1385, %v1561
  %v1563 = vpop.f32.mrb[0].mxu0
  %1564 = vmatprep.mubr.bf16.mxu0 0
  %1565 = vmatmul.mubr.bf16.gmra.mrb[0].mxu0 %v1227
  %v1566 = vpop.f32.mrb[0].mxu0
  %v1567 = vadd.f32 %v1390, %v1566
  %v1568 = vpop.f32.mrb[0].mxu0
  %v1569 = vpop.f32.mrb[0].mxu0
  %v1570 = vadd.f32 %v1393, %v1569
  %v1571 = vpop.f32.mrb[0].mxu0
  %1572 = vmatprep.mubr.bf16.mxu0 0
  %1573 = vmatmul.mubr.bf16.gmra.mrb[0].mxu0 %v1230
  %v1574 = vpop.f32.mrb[0].mxu0
  %v1575 = vadd.f32 %v1398, %v1574
  %v1576 = vpop.f32.mrb[0].mxu0
  %v1577 = vpop.f32.mrb[0].mxu0
  %v1578 = vadd.f32 %v1401, %v1577
  %v1579 = vpop.f32.mrb[0].mxu0
  %1580 = vmatprep.mubr.bf16.mxu0 0
  %1581 = vmatmul.mubr.bf16.gmra.mrb[0].mxu0 %v1233
  %v1582 = vpop.f32.mrb[0].mxu0
  %v1583 = vadd.f32 %v1406, %v1582
  %v1584 = vpop.f32.mrb[0].mxu0
  %v1585 = vpop.f32.mrb[0].mxu0
  %v1586 = vadd.f32 %v1409, %v1585
  %v1587 = vpop.f32.mrb[0].mxu0
  %1588 = vdwg.mxu0
  %v1589 = vmax.f32 %v1447, 0.0
  %v1590 = vmax.f32 %v1450, 0.0
  %v1591 = vmax.f32 %v1455, 0.0
  %v1592 = vmax.f32 %v1458, 0.0
  %v1593 = vmax.f32 %v1463, 0.0
  %v1594 = vmax.f32 %v1466, 0.0
  %v1595 = vmax.f32 %v1471, 0.0
  %v1596 = vmax.f32 %v1474, 0.0
  %v1597 = vmax.f32 %v1479, 0.0
  %v1598 = vmax.f32 %v1482, 0.0
  %v1599 = vmax.f32 %v1487, 0.0
  %v1600 = vmax.f32 %v1490, 0.0
  %v1601 = vmax.f32 %v1495, 0.0
  %v1602 = vmax.f32 %v1498, 0.0
  %v1603 = vmax.f32 %v1503, 0.0
  %v1604 = vmax.f32 %v1506, 0.0
  %v1605 = vmax.f32 %v1511, 0.0
  %v1606 = vmax.f32 %v1514, 0.0
  %v1607 = vmax.f32 %v1519, 0.0
  %v1608 = vmax.f32 %v1522, 0.0
  %v1609 = vmax.f32 %v1527, 0.0
  %v1610 = vmax.f32 %v1530, 0.0
  %v1611 = vmax.f32 %v1535, 0.0
  %v1612 = vmax.f32 %v1538, 0.0
  %v1613 = vmax.f32 %v1543, 0.0
  %v1614 = vmax.f32 %v1546, 0.0
  %v1615 = vmax.f32 %v1551, 0.0
  %v1616 = vmax.f32 %v1554, 0.0
  %v1617 = vmax.f32 %v1559, 0.0
  %v1618 = vmax.f32 %v1562, 0.0
  %v1619 = vmax.f32 %v1567, 0.0
  %v1620 = vmax.f32 %v1570, 0.0
  %v1621 = vmax.f32 %v1575, 0.0
  %v1622 = vmax.f32 %v1578, 0.0
  %v1623 = vmax.f32 %v1583, 0.0
  %v1624 = vmax.f32 %v1586, 0.0
  %1625 = vst.msk [vmem:[#allocation2] sm:$0xff] %vm1180, %v1589
  %1627 = vrot.lane.b32.xlu0 %v1590, 32
  %v1628 = vpop.permute.xlu0 %1627
  %vm1630 = vcmask 523520
  %1631 = vst.msk [vmem:[#allocation2] sm:$0xff] %vm1630, %v1628
  %1633 = vrot.lane.b32.xlu0 %v1591, 64
  %v1634 = vpop.permute.xlu0 %1633
  %vm1636 = vcmask 785920
  %1637 = vst.msk [vmem:[#allocation2] sm:$0xff] %vm1636, %v1634
  %1639 = vrot.lane.b32.xlu0 %v1592, 96
  %v1640 = vpop.permute.xlu0 %1639
  %vm1642 = vcmask 1048320
  %1643 = vst.msk [vmem:[#allocation2] sm:$0xff] %vm1642, %v1640
  %1644 = vst.msk [vmem:[#allocation2 + $0x8] sm:$0xff] %vm1180, %v1593
  %1646 = vrot.lane.b32.xlu0 %v1594, 32
  %v1647 = vpop.permute.xlu0 %1646
  %1649 = vst.msk [vmem:[#allocation2 + $0x8] sm:$0xff] %vm1630, %v1647
  %1651 = vrot.lane.b32.xlu0 %v1595, 64
  %v1652 = vpop.permute.xlu0 %1651
  %1654 = vst.msk [vmem:[#allocation2 + $0x8] sm:$0xff] %vm1636, %v1652
  %1656 = vrot.lane.b32.xlu0 %v1596, 96
  %v1657 = vpop.permute.xlu0 %1656
  %1659 = vst.msk [vmem:[#allocation2 + $0x8] sm:$0xff] %vm1642, %v1657
  %1660 = vst.msk [vmem:[#allocation2 + $0x10] sm:$0xff] %vm1180, %v1597
  %1662 = vrot.lane.b32.xlu0 %v1598, 32
  %v1663 = vpop.permute.xlu0 %1662
  %1665 = vst.msk [vmem:[#allocation2 + $0x10] sm:$0xff] %vm1630, %v1663
  %1667 = vrot.lane.b32.xlu0 %v1599, 64
  %v1668 = vpop.permute.xlu0 %1667
  %1670 = vst.msk [vmem:[#allocation2 + $0x10] sm:$0xff] %vm1636, %v1668
  %1672 = vrot.lane.b32.xlu0 %v1600, 96
  %v1673 = vpop.permute.xlu0 %1672
  %1675 = vst.msk [vmem:[#allocation2 + $0x10] sm:$0xff] %vm1642, %v1673
  %1676 = vst.msk [vmem:[#allocation2 + $0x18] sm:$0xff] %vm1180, %v1601
  %1678 = vrot.lane.b32.xlu0 %v1602, 32
  %v1679 = vpop.permute.xlu0 %1678
  %1681 = vst.msk [vmem:[#allocation2 + $0x18] sm:$0xff] %vm1630, %v1679
  %1683 = vrot.lane.b32.xlu0 %v1603, 64
  %v1684 = vpop.permute.xlu0 %1683
  %1686 = vst.msk [vmem:[#allocation2 + $0x18] sm:$0xff] %vm1636, %v1684
  %1688 = vrot.lane.b32.xlu0 %v1604, 96
  %v1689 = vpop.permute.xlu0 %1688
  %1691 = vst.msk [vmem:[#allocation2 + $0x18] sm:$0xff] %vm1642, %v1689
  %1692 = vst.msk [vmem:[#allocation2 + $0x20] sm:$0xff] %vm1180, %v1605
  %1694 = vrot.lane.b32.xlu0 %v1606, 32
  %v1695 = vpop.permute.xlu0 %1694
  %1697 = vst.msk [vmem:[#allocation2 + $0x20] sm:$0xff] %vm1630, %v1695
  %1699 = vrot.lane.b32.xlu0 %v1607, 64
  %v1700 = vpop.permute.xlu0 %1699
  %1702 = vst.msk [vmem:[#allocation2 + $0x20] sm:$0xff] %vm1636, %v1700
  %1704 = vrot.lane.b32.xlu0 %v1608, 96
  %v1705 = vpop.permute.xlu0 %1704
  %1707 = vst.msk [vmem:[#allocation2 + $0x20] sm:$0xff] %vm1642, %v1705
  %1708 = vst.msk [vmem:[#allocation2 + $0x28] sm:$0xff] %vm1180, %v1609
  %1710 = vrot.lane.b32.xlu0 %v1610, 32
  %v1711 = vpop.permute.xlu0 %1710
  %1713 = vst.msk [vmem:[#allocation2 + $0x28] sm:$0xff] %vm1630, %v1711
  %1715 = vrot.lane.b32.xlu0 %v1611, 64
  %v1716 = vpop.permute.xlu0 %1715
  %1718 = vst.msk [vmem:[#allocation2 + $0x28] sm:$0xff] %vm1636, %v1716
  %1720 = vrot.lane.b32.xlu0 %v1612, 96
  %v1721 = vpop.permute.xlu0 %1720
  %1723 = vst.msk [vmem:[#allocation2 + $0x28] sm:$0xff] %vm1642, %v1721
  %1724 = vst.msk [vmem:[#allocation2 + $0x30] sm:$0xff] %vm1180, %v1613
  %1726 = vrot.lane.b32.xlu0 %v1614, 32
  %v1727 = vpop.permute.xlu0 %1726
  %1729 = vst.msk [vmem:[#allocation2 + $0x30] sm:$0xff] %vm1630, %v1727
  %1731 = vrot.lane.b32.xlu0 %v1615, 64
  %v1732 = vpop.permute.xlu0 %1731
  %1734 = vst.msk [vmem:[#allocation2 + $0x30] sm:$0xff] %vm1636, %v1732
  %1736 = vrot.lane.b32.xlu0 %v1616, 96
  %v1737 = vpop.permute.xlu0 %1736
  %1739 = vst.msk [vmem:[#allocation2 + $0x30] sm:$0xff] %vm1642, %v1737
  %1740 = vst.msk [vmem:[#allocation2 + $0x38] sm:$0xff] %vm1180, %v1617
  %1742 = vrot.lane.b32.xlu0 %v1618, 32
  %v1743 = vpop.permute.xlu0 %1742
  %1745 = vst.msk [vmem:[#allocation2 + $0x38] sm:$0xff] %vm1630, %v1743
  %1747 = vrot.lane.b32.xlu0 %v1619, 64
  %v1748 = vpop.permute.xlu0 %1747
  %1750 = vst.msk [vmem:[#allocation2 + $0x38] sm:$0xff] %vm1636, %v1748
  %1752 = vrot.lane.b32.xlu0 %v1620, 96
  %v1753 = vpop.permute.xlu0 %1752
  %1755 = vst.msk [vmem:[#allocation2 + $0x38] sm:$0xff] %vm1642, %v1753
  %1756 = vst.msk [vmem:[#allocation2 + $0x40] sm:$0xff] %vm1180, %v1621
  %1758 = vrot.lane.b32.xlu0 %v1622, 32
  %v1759 = vpop.permute.xlu0 %1758
  %1761 = vst.msk [vmem:[#allocation2 + $0x40] sm:$0xff] %vm1630, %v1759
  %1763 = vrot.lane.b32.xlu0 %v1623, 64
  %v1764 = vpop.permute.xlu0 %1763
  %1766 = vst.msk [vmem:[#allocation2 + $0x40] sm:$0xff] %vm1636, %v1764
  %1768 = vrot.lane.b32.xlu0 %v1624, 96
  %v1769 = vpop.permute.xlu0 %1768
  %1771 = vst.msk [vmem:[#allocation2 + $0x40] sm:$0xff] %vm1642, %v1769
  %v1772 = vld [vmem:[#allocation2] sm:$0xff]
  %v1773 = vld [vmem:[#allocation2 + $0x8] sm:$0xff]
  %v1774 = vld [vmem:[#allocation2 + $0x10] sm:$0xff]
  %v1775 = vld [vmem:[#allocation2 + $0x18] sm:$0xff]
  %v1776 = vld [vmem:[#allocation2 + $0x20] sm:$0xff]
  %v1777 = vld [vmem:[#allocation2 + $0x28] sm:$0xff]
  %v1778 = vld [vmem:[#allocation2 + $0x30] sm:$0xff]
  %v1779 = vld [vmem:[#allocation2 + $0x38] sm:$0xff]
  %v1780 = vld [vmem:[#allocation2 + $0x40] sm:$0xff]
  %v1781 = vpack.c.bf16 %v1772, %v1772
  %v1782 = vpack.c.bf16 %v1773, %v1773
  %v1783 = vpack.c.bf16 %v1774, %v1774
  %v1784 = vpack.c.bf16 %v1775, %v1775
  %v1785 = vpack.c.bf16 %v1776, %v1776
  %v1786 = vpack.c.bf16 %v1777, %v1777
  %v1787 = vpack.c.bf16 %v1778, %v1778
  %v1788 = vpack.c.bf16 %v1779, %v1779
  %v1789 = vpack.c.bf16 %v1780, %v1780
  %v1790 = vld [vmem:[%s5] sm:$0xf]
  %v1791 = vld [vmem:[%s5 + $0x4] sm:$0xf]
  %v1792 = vld [vmem:[%s5 + $0x8] sm:$0xf]
  %v1793 = vld [vmem:[%s5 + $0xc] sm:$0xf]
  %v1794 = vld [vmem:[%s5 + $0x10] sm:$0xf]
  %v1795 = vld [vmem:[%s5 + $0x14] sm:$0xf]
  %v1796 = vld [vmem:[%s5 + $0x18] sm:$0xf]
  %v1797 = vld [vmem:[%s5 + $0x1c] sm:$0xf]
  %v1798 = vld [vmem:[%s5 + $0x20] sm:$0xf]
  %v1799 = vld [vmem:[%s5 + $0x24] sm:$0xf]
  %v1800 = vld [vmem:[%s5 + $0x28] sm:$0xf]
  %v1801 = vld [vmem:[%s5 + $0x2c] sm:$0xf]
  %v1802 = vld [vmem:[%s5 + $0x30] sm:$0xf]
  %v1803 = vld [vmem:[%s5 + $0x34] sm:$0xf]
  %v1804 = vld [vmem:[%s5 + $0x38] sm:$0xf]
  %v1805 = vld [vmem:[%s5 + $0x3c] sm:$0xf]
  %v1806 = vld [vmem:[%s5 + $0x40] sm:$0xf]
  %v1807 = vld [vmem:[%s5 + $0x44] sm:$0xf]
  %v1808 = vld [vmem:[%s5 + $0x48] sm:$0xf]
  %v1809 = vld [vmem:[%s5 + $0x4c] sm:$0xf]
  %v1810 = vld [vmem:[%s5 + $0x50] sm:$0xf]
  %v1811 = vld [vmem:[%s5 + $0x54] sm:$0xf]
  %v1812 = vld [vmem:[%s5 + $0x58] sm:$0xf]
  %v1813 = vld [vmem:[%s5 + $0x5c] sm:$0xf]
  %v1814 = vld [vmem:[%s5 + $0x60] sm:$0xf]
  %v1815 = vld [vmem:[%s5 + $0x64] sm:$0xf]
  %v1816 = vld [vmem:[%s5 + $0x68] sm:$0xf]
  %v1817 = vld [vmem:[%s5 + $0x6c] sm:$0xf]
  %v1818 = vld [vmem:[%s5 + $0x70] sm:$0xf]
  %v1819 = vld [vmem:[%s5 + $0x74] sm:$0xf]
  %v1820 = vld [vmem:[%s5 + $0x78] sm:$0xf]
  %v1821 = vld [vmem:[%s5 + $0x7c] sm:$0xf]
  %v1822 = vld [vmem:[%s5 + $0x80] sm:$0xf]
  %v1823 = vld [vmem:[%s5 + $0x84] sm:$0xf]
  %v1824 = vld [vmem:[%s5 + $0x88] sm:$0xf]
  %v1825 = vld [vmem:[%s5 + $0x8c] sm:$0xf]
  %v1826 = vld [vmem:[%s5 + $0x90] sm:$0xf]
  %v1827 = vld [vmem:[%s5 + $0x94] sm:$0xf]
  %v1828 = vld [vmem:[%s5 + $0x98] sm:$0xf]
  %v1829 = vld [vmem:[%s5 + $0x9c] sm:$0xf]
  %v1830 = vld [vmem:[%s5 + $0xa0] sm:$0xf]
  %v1831 = vld [vmem:[%s5 + $0xa4] sm:$0xf]
  %v1832 = vld [vmem:[%s5 + $0xa8] sm:$0xf]
  %v1833 = vld [vmem:[%s5 + $0xac] sm:$0xf]
  %v1834 = vld [vmem:[%s5 + $0xb0] sm:$0xf]
  %v1835 = vld [vmem:[%s5 + $0xb4] sm:$0xf]
  %v1836 = vld [vmem:[%s5 + $0xb8] sm:$0xf]
  %v1837 = vld [vmem:[%s5 + $0xbc] sm:$0xf]
  %v1838 = vld [vmem:[%s5 + $0xc0] sm:$0xf]
  %v1839 = vld [vmem:[%s5 + $0xc4] sm:$0xf]
  %v1840 = vld [vmem:[%s5 + $0xc8] sm:$0xf]
  %v1841 = vld [vmem:[%s5 + $0xcc] sm:$0xf]
  %v1842 = vld [vmem:[%s5 + $0xd0] sm:$0xf]
  %v1843 = vld [vmem:[%s5 + $0xd4] sm:$0xf]
  %v1844 = vld [vmem:[%s5 + $0xd8] sm:$0xf]
  %v1845 = vld [vmem:[%s5 + $0xdc] sm:$0xf]
  %v1846 = vld [vmem:[%s5 + $0xe0] sm:$0xf]
  %v1847 = vld [vmem:[%s5 + $0xe4] sm:$0xf]
  %v1848 = vld [vmem:[%s5 + $0xe8] sm:$0xf]
  %v1849 = vld [vmem:[%s5 + $0xec] sm:$0xf]
  %v1850 = vld [vmem:[%s5 + $0xf0] sm:$0xf]
  %v1851 = vld [vmem:[%s5 + $0xf4] sm:$0xf]
  %v1852 = vld [vmem:[%s5 + $0xf8] sm:$0xf]
  %v1853 = vld [vmem:[%s5 + $0xfc] sm:$0xf]
  %v1854 = vld [vmem:[%s5 + $0x100] sm:$0xf]
  %v1855 = vld [vmem:[%s5 + $0x104] sm:$0xf]
  %v1856 = vld [vmem:[%s5 + $0x108] sm:$0xf]
  %v1857 = vld [vmem:[%s5 + $0x10c] sm:$0xf]
  %v1858 = vld [vmem:[%s5 + $0x110] sm:$0xf]
  %v1859 = vld [vmem:[%s5 + $0x114] sm:$0xf]
  %v1860 = vld [vmem:[%s5 + $0x118] sm:$0xf]
  %v1861 = vld [vmem:[%s5 + $0x11c] sm:$0xf]
  %v1862 = vld [vmem:[%s5 + $0x120] sm:$0xf]
  %v1863 = vld [vmem:[%s5 + $0x124] sm:$0xf]
  %v1864 = vld [vmem:[%s5 + $0x128] sm:$0xf]
  %v1865 = vld [vmem:[%s5 + $0x12c] sm:$0xf]
  %v1866 = vld [vmem:[%s5 + $0x130] sm:$0xf]
  %v1867 = vld [vmem:[%s5 + $0x134] sm:$0xf]
  %v1868 = vld [vmem:[%s5 + $0x138] sm:$0xf]
  %v1869 = vld [vmem:[%s5 + $0x13c] sm:$0xf]
  %v1870 = vld [vmem:[%s5 + $0x140] sm:$0xf]
  %v1871 = vld [vmem:[%s5 + $0x144] sm:$0xf]
  %v1872 = vld [vmem:[%s5 + $0x148] sm:$0xf]
  %v1873 = vld [vmem:[%s5 + $0x14c] sm:$0xf]
  %v1874 = vld [vmem:[%s5 + $0x150] sm:$0xf]
  %v1875 = vld [vmem:[%s5 + $0x154] sm:$0xf]
  %v1876 = vld [vmem:[%s5 + $0x158] sm:$0xf]
  %v1877 = vld [vmem:[%s5 + $0x15c] sm:$0xf]
  %v1878 = vld [vmem:[%s5 + $0x160] sm:$0xf]
  %v1879 = vld [vmem:[%s5 + $0x164] sm:$0xf]
  %v1880 = vld [vmem:[%s5 + $0x168] sm:$0xf]
  %v1881 = vld [vmem:[%s5 + $0x16c] sm:$0xf]
  %v1882 = vld [vmem:[%s5 + $0x170] sm:$0xf]
  %v1883 = vld [vmem:[%s5 + $0x174] sm:$0xf]
  %v1884 = vld [vmem:[%s5 + $0x178] sm:$0xf]
  %v1885 = vld [vmem:[%s5 + $0x17c] sm:$0xf]
  %v1886 = vld [vmem:[%s5 + $0x180] sm:$0xf]
  %v1887 = vld [vmem:[%s5 + $0x184] sm:$0xf]
  %v1888 = vld [vmem:[%s5 + $0x188] sm:$0xf]
  %v1889 = vld [vmem:[%s5 + $0x18c] sm:$0xf]
  %v1890 = vld [vmem:[%s5 + $0x190] sm:$0xf]
  %v1891 = vld [vmem:[%s5 + $0x194] sm:$0xf]
  %v1892 = vld [vmem:[%s5 + $0x198] sm:$0xf]
  %v1893 = vld [vmem:[%s5 + $0x19c] sm:$0xf]
  %v1894 = vld [vmem:[%s5 + $0x1a0] sm:$0xf]
  %v1895 = vld [vmem:[%s5 + $0x1a4] sm:$0xf]
  %v1896 = vld [vmem:[%s5 + $0x1a8] sm:$0xf]
  %v1897 = vld [vmem:[%s5 + $0x1ac] sm:$0xf]
  %v1898 = vld [vmem:[%s5 + $0x1b0] sm:$0xf]
  %v1899 = vld [vmem:[%s5 + $0x1b4] sm:$0xf]
  %v1900 = vld [vmem:[%s5 + $0x1b8] sm:$0xf]
  %v1901 = vld [vmem:[%s5 + $0x1bc] sm:$0xf]
  %v1902 = vld [vmem:[%s5 + $0x1c0] sm:$0xf]
  %v1903 = vld [vmem:[%s5 + $0x1c4] sm:$0xf]
  %v1904 = vld [vmem:[%s5 + $0x1c8] sm:$0xf]
  %v1905 = vld [vmem:[%s5 + $0x1cc] sm:$0xf]
  %v1906 = vld [vmem:[%s5 + $0x1d0] sm:$0xf]
  %v1907 = vld [vmem:[%s5 + $0x1d4] sm:$0xf]
  %v1908 = vld [vmem:[%s5 + $0x1d8] sm:$0xf]
  %v1909 = vld [vmem:[%s5 + $0x1dc] sm:$0xf]
  %v1910 = vld [vmem:[%s5 + $0x1e0] sm:$0xf]
  %v1911 = vld [vmem:[%s5 + $0x1e4] sm:$0xf]
  %v1912 = vld [vmem:[%s5 + $0x1e8] sm:$0xf]
  %v1913 = vld [vmem:[%s5 + $0x1ec] sm:$0xf]
  %v1914 = vld [vmem:[%s5 + $0x1f0] sm:$0xf]
  %v1915 = vld [vmem:[%s5 + $0x1f4] sm:$0xf]
  %v1916 = vld [vmem:[%s5 + $0x1f8] sm:$0xf]
  %v1917 = vld [vmem:[%s5 + $0x1fc] sm:$0xf]
  %v1918 = vld [vmem:[%s5 + $0x200] sm:$0xf]
  %v1919 = vld [vmem:[%s5 + $0x204] sm:$0xf]
  %v1920 = vld [vmem:[%s5 + $0x208] sm:$0xf]
  %v1921 = vld [vmem:[%s5 + $0x20c] sm:$0xf]
  %v1922 = vld [vmem:[%s5 + $0x210] sm:$0xf]
  %v1923 = vld [vmem:[%s5 + $0x214] sm:$0xf]
  %v1924 = vld [vmem:[%s5 + $0x218] sm:$0xf]
  %v1925 = vld [vmem:[%s5 + $0x21c] sm:$0xf]
  %v1926 = vld [vmem:[%s5 + $0x220] sm:$0xf]
  %v1927 = vld [vmem:[%s5 + $0x224] sm:$0xf]
  %v1928 = vld [vmem:[%s5 + $0x228] sm:$0xf]
  %v1929 = vld [vmem:[%s5 + $0x22c] sm:$0xf]
  %v1930 = vld [vmem:[%s5 + $0x230] sm:$0xf]
  %v1931 = vld [vmem:[%s5 + $0x234] sm:$0xf]
  %v1932 = vld [vmem:[%s5 + $0x238] sm:$0xf]
  %v1933 = vld [vmem:[%s5 + $0x23c] sm:$0xf]
  %v1934 = vld [vmem:[%s6] sm:$0x1]
  %v1936 = vlaneseq
  %v1937 = vshrl.u32 %v1936, 7
  %v1938 = vsub.s32 0, %v1937
  %v1939 = vrot.slane %v1934, %v1938
  %v2085 = vunpack.c.l.b16 %v1790
  %v2086 = vunpack.c.l.b16 %v1791
  %v2087 = vunpack.c.l.b16 %v1792
  %v2088 = vunpack.c.l.b16 %v1793
  %v2089 = vunpack.c.l.b16 %v1794
  %v2090 = vunpack.c.l.b16 %v1795
  %v2091 = vunpack.c.l.b16 %v1796
  %v2092 = vunpack.c.l.b16 %v1797
  %v2093 = vunpack.c.l.b16 %v1798
  %v2094 = vunpack.c.l.b16 %v1799
  %v2095 = vunpack.c.l.b16 %v1800
  %v2096 = vunpack.c.l.b16 %v1801
  %v2097 = vunpack.c.l.b16 %v1802
  %v2098 = vunpack.c.l.b16 %v1803
  %v2099 = vunpack.c.l.b16 %v1804
  %v2100 = vunpack.c.l.b16 %v1805
  %v2101 = vunpack.c.l.b16 %v1806
  %v2102 = vunpack.c.l.b16 %v1807
  %v2103 = vunpack.c.l.b16 %v1808
  %v2104 = vunpack.c.l.b16 %v1809
  %v2105 = vunpack.c.l.b16 %v1810
  %v2106 = vunpack.c.l.b16 %v1811
  %v2107 = vunpack.c.l.b16 %v1812
  %v2108 = vunpack.c.l.b16 %v1813
  %v2109 = vunpack.c.l.b16 %v1814
  %v2110 = vunpack.c.l.b16 %v1815
  %v2111 = vunpack.c.l.b16 %v1816
  %v2112 = vunpack.c.l.b16 %v1817
  %v2113 = vunpack.c.l.b16 %v1818
  %v2114 = vunpack.c.l.b16 %v1819
  %v2115 = vunpack.c.l.b16 %v1820
  %v2116 = vunpack.c.l.b16 %v1821
  %v2117 = vunpack.c.l.b16 %v1822
  %v2118 = vunpack.c.l.b16 %v1823
  %v2119 = vunpack.c.l.b16 %v1824
  %v2120 = vunpack.c.l.b16 %v1825
  %v2121 = vunpack.c.l.b16 %v1826
  %v2122 = vunpack.c.l.b16 %v1827
  %v2123 = vunpack.c.l.b16 %v1828
  %v2124 = vunpack.c.l.b16 %v1829
  %v2125 = vunpack.c.l.b16 %v1830
  %v2126 = vunpack.c.l.b16 %v1831
  %v2127 = vunpack.c.l.b16 %v1832
  %v2128 = vunpack.c.l.b16 %v1833
  %v2129 = vunpack.c.l.b16 %v1834
  %v2130 = vunpack.c.l.b16 %v1835
  %v2131 = vunpack.c.l.b16 %v1836
  %v2132 = vunpack.c.l.b16 %v1837
  %v2133 = vunpack.c.l.b16 %v1838
  %v2134 = vunpack.c.l.b16 %v1839
  %v2135 = vunpack.c.l.b16 %v1840
  %v2136 = vunpack.c.l.b16 %v1841
  %v2137 = vunpack.c.l.b16 %v1842
  %v2138 = vunpack.c.l.b16 %v1843
  %v2139 = vunpack.c.l.b16 %v1844
  %v2140 = vunpack.c.l.b16 %v1845
  %v2141 = vunpack.c.l.b16 %v1846
  %v2142 = vunpack.c.l.b16 %v1847
  %v2143 = vunpack.c.l.b16 %v1848
  %v2144 = vunpack.c.l.b16 %v1849
  %v2145 = vunpack.c.l.b16 %v1850
  %v2146 = vunpack.c.l.b16 %v1851
  %v2147 = vunpack.c.l.b16 %v1852
  %v2148 = vunpack.c.l.b16 %v1853
  %v2149 = vunpack.c.l.b16 %v1854
  %v2150 = vunpack.c.l.b16 %v1855
  %v2151 = vunpack.c.l.b16 %v1856
  %v2152 = vunpack.c.l.b16 %v1857
  %v2153 = vunpack.c.l.b16 %v1858
  %v2154 = vunpack.c.l.b16 %v1859
  %v2155 = vunpack.c.l.b16 %v1860
  %v2156 = vunpack.c.l.b16 %v1861
  %v2157 = vunpack.c.l.b16 %v1862
  %v2158 = vunpack.c.l.b16 %v1863
  %v2159 = vunpack.c.l.b16 %v1864
  %v2160 = vunpack.c.l.b16 %v1865
  %v2161 = vunpack.c.l.b16 %v1866
  %v2162 = vunpack.c.l.b16 %v1867
  %v2163 = vunpack.c.l.b16 %v1868
  %v2164 = vunpack.c.l.b16 %v1869
  %v2165 = vunpack.c.l.b16 %v1870
  %v2166 = vunpack.c.l.b16 %v1871
  %v2167 = vunpack.c.l.b16 %v1872
  %v2168 = vunpack.c.l.b16 %v1873
  %v2169 = vunpack.c.l.b16 %v1874
  %v2170 = vunpack.c.l.b16 %v1875
  %v2171 = vunpack.c.l.b16 %v1876
  %v2172 = vunpack.c.l.b16 %v1877
  %v2173 = vunpack.c.l.b16 %v1878
  %v2174 = vunpack.c.l.b16 %v1879
  %v2175 = vunpack.c.l.b16 %v1880
  %v2176 = vunpack.c.l.b16 %v1881
  %v2177 = vunpack.c.l.b16 %v1882
  %v2178 = vunpack.c.l.b16 %v1883
  %v2179 = vunpack.c.l.b16 %v1884
  %v2180 = vunpack.c.l.b16 %v1885
  %v2181 = vunpack.c.l.b16 %v1886
  %v2182 = vunpack.c.l.b16 %v1887
  %v2183 = vunpack.c.l.b16 %v1888
  %v2184 = vunpack.c.l.b16 %v1889
  %v2185 = vunpack.c.l.b16 %v1890
  %v2186 = vunpack.c.l.b16 %v1891
  %v2187 = vunpack.c.l.b16 %v1892
  %v2188 = vunpack.c.l.b16 %v1893
  %v2189 = vunpack.c.l.b16 %v1894
  %v2190 = vunpack.c.l.b16 %v1895
  %v2191 = vunpack.c.l.b16 %v1896
  %v2192 = vunpack.c.l.b16 %v1897
  %v2193 = vunpack.c.l.b16 %v1898
  %v2194 = vunpack.c.l.b16 %v1899
  %v2195 = vunpack.c.l.b16 %v1900
  %v2196 = vunpack.c.l.b16 %v1901
  %v2197 = vunpack.c.l.b16 %v1902
  %v2198 = vunpack.c.l.b16 %v1903
  %v2199 = vunpack.c.l.b16 %v1904
  %v2200 = vunpack.c.l.b16 %v1905
  %v2201 = vunpack.c.l.b16 %v1906
  %v2202 = vunpack.c.l.b16 %v1907
  %v2203 = vunpack.c.l.b16 %v1908
  %v2204 = vunpack.c.l.b16 %v1909
  %v2205 = vunpack.c.l.b16 %v1910
  %v2206 = vunpack.c.l.b16 %v1911
  %v2207 = vunpack.c.l.b16 %v1912
  %v2208 = vunpack.c.l.b16 %v1913
  %v2209 = vunpack.c.l.b16 %v1914
  %v2210 = vunpack.c.l.b16 %v1915
  %v2211 = vunpack.c.l.b16 %v1916
  %v2212 = vunpack.c.l.b16 %v1917
  %v2213 = vunpack.c.l.b16 %v1918
  %v2214 = vunpack.c.l.b16 %v1919
  %v2215 = vunpack.c.l.b16 %v1920
  %v2216 = vunpack.c.l.b16 %v1921
  %v2217 = vunpack.c.l.b16 %v1922
  %v2218 = vunpack.c.l.b16 %v1923
  %v2219 = vunpack.c.l.b16 %v1924
  %v2220 = vunpack.c.l.b16 %v1925
  %v2221 = vunpack.c.l.b16 %v1926
  %v2222 = vunpack.c.l.b16 %v1927
  %v2223 = vunpack.c.l.b16 %v1928
  %v2224 = vunpack.c.l.b16 %v1929
  %v2225 = vunpack.c.l.b16 %v1930
  %v2226 = vunpack.c.l.b16 %v1931
  %v2227 = vunpack.c.l.b16 %v1932
  %v2228 = vunpack.c.l.b16 %v1933
  %v2229 = vpack.c.b16 %v2086, %v2085
  %v2230 = vpack.c.b16 %v2088, %v2087
  %v2231 = vpack.c.b16 %v2090, %v2089
  %v2232 = vpack.c.b16 %v2092, %v2091
  %v2233 = vpack.c.b16 %v2094, %v2093
  %v2234 = vpack.c.b16 %v2096, %v2095
  %v2235 = vpack.c.b16 %v2098, %v2097
  %v2236 = vpack.c.b16 %v2100, %v2099
  %v2237 = vpack.c.b16 %v2102, %v2101
  %v2238 = vpack.c.b16 %v2104, %v2103
  %v2239 = vpack.c.b16 %v2106, %v2105
  %v2240 = vpack.c.b16 %v2108, %v2107
  %v2241 = vpack.c.b16 %v2110, %v2109
  %v2242 = vpack.c.b16 %v2112, %v2111
  %v2243 = vpack.c.b16 %v2114, %v2113
  %v2244 = vpack.c.b16 %v2116, %v2115
  %v2245 = vpack.c.b16 %v2118, %v2117
  %v2246 = vpack.c.b16 %v2120, %v2119
  %v2247 = vpack.c.b16 %v2122, %v2121
  %v2248 = vpack.c.b16 %v2124, %v2123
  %v2249 = vpack.c.b16 %v2126, %v2125
  %v2250 = vpack.c.b16 %v2128, %v2127
  %v2251 = vpack.c.b16 %v2130, %v2129
  %v2252 = vpack.c.b16 %v2132, %v2131
  %v2253 = vpack.c.b16 %v2134, %v2133
  %v2254 = vpack.c.b16 %v2136, %v2135
  %v2255 = vpack.c.b16 %v2138, %v2137
  %v2256 = vpack.c.b16 %v2140, %v2139
  %v2257 = vpack.c.b16 %v2142, %v2141
  %v2258 = vpack.c.b16 %v2144, %v2143
  %v2259 = vpack.c.b16 %v2146, %v2145
  %v2260 = vpack.c.b16 %v2148, %v2147
  %v2261 = vpack.c.b16 %v2150, %v2149
  %v2262 = vpack.c.b16 %v2152, %v2151
  %v2263 = vpack.c.b16 %v2154, %v2153
  %v2264 = vpack.c.b16 %v2156, %v2155
  %v2265 = vpack.c.b16 %v2158, %v2157
  %v2266 = vpack.c.b16 %v2160, %v2159
  %v2267 = vpack.c.b16 %v2162, %v2161
  %v2268 = vpack.c.b16 %v2164, %v2163
  %v2269 = vpack.c.b16 %v2166, %v2165
  %v2270 = vpack.c.b16 %v2168, %v2167
  %v2271 = vpack.c.b16 %v2170, %v2169
  %v2272 = vpack.c.b16 %v2172, %v2171
  %v2273 = vpack.c.b16 %v2174, %v2173
  %v2274 = vpack.c.b16 %v2176, %v2175
  %v2275 = vpack.c.b16 %v2178, %v2177
  %v2276 = vpack.c.b16 %v2180, %v2179
  %v2277 = vpack.c.b16 %v2182, %v2181
  %v2278 = vpack.c.b16 %v2184, %v2183
  %v2279 = vpack.c.b16 %v2186, %v2185
  %v2280 = vpack.c.b16 %v2188, %v2187
  %v2281 = vpack.c.b16 %v2190, %v2189
  %v2282 = vpack.c.b16 %v2192, %v2191
  %v2283 = vpack.c.b16 %v2194, %v2193
  %v2284 = vpack.c.b16 %v2196, %v2195
  %v2285 = vpack.c.b16 %v2198, %v2197
  %v2286 = vpack.c.b16 %v2200, %v2199
  %v2287 = vpack.c.b16 %v2202, %v2201
  %v2288 = vpack.c.b16 %v2204, %v2203
  %v2289 = vpack.c.b16 %v2206, %v2205
  %v2290 = vpack.c.b16 %v2208, %v2207
  %v2291 = vpack.c.b16 %v2210, %v2209
  %v2292 = vpack.c.b16 %v2212, %v2211
  %v2293 = vpack.c.b16 %v2214, %v2213
  %v2294 = vpack.c.b16 %v2216, %v2215
  %v2295 = vpack.c.b16 %v2218, %v2217
  %v2296 = vpack.c.b16 %v2220, %v2219
  %v2297 = vpack.c.b16 %v2222, %v2221
  %v2298 = vpack.c.b16 %v2224, %v2223
  %v2299 = vpack.c.b16 %v2226, %v2225
  %v2300 = vpack.c.b16 %v2228, %v2227
  %2373 = vmatprep.subr.bf16.mxu0 0
  %2374 = vmatpush1.bf16.msra.mxu0 %v2229
  %2375 = vmatprep.subr.bf16.mxu0 0
  %2376 = vmatpush1.bf16.msra.mxu0 %v2230
  %2377 = vmatprep.subr.bf16.mxu0 0
  %2378 = vmatpush1.bf16.msra.mxu0 %v2231
  %2379 = vmatprep.subr.bf16.mxu0 0
  %2380 = vmatpush1.bf16.msra.mxu0 %v2232
  %2381 = vmatprep.subr.bf16.mxu0 0
  %2382 = vmatpush1.bf16.msra.mxu0 %v2233
  %2383 = vmatprep.subr.bf16.mxu0 0
  %2384 = vmatpush1.bf16.msra.mxu0 %v2234
  %2385 = vmatprep.subr.bf16.mxu0 0
  %2386 = vmatpush1.bf16.msra.mxu0 %v2235
  %2387 = vmatprep.subr.bf16.mxu0 0
  %2388 = vmatpush1.bf16.msra.mxu0 %v2236
  %2389 = vmatprep.subr.bf16.mxu0 0
  %2390 = vmatpush1.bf16.msra.mxu0 %v2237
  %2391 = vmatprep.subr.bf16.mxu0 0
  %2392 = vmatpush1.bf16.msra.mxu0 %v2238
  %2393 = vmatprep.subr.bf16.mxu0 0
  %2394 = vmatpush1.bf16.msra.mxu0 %v2239
  %2395 = vmatprep.subr.bf16.mxu0 0
  %2396 = vmatpush1.bf16.msra.mxu0 %v2240
  %2397 = vmatprep.subr.bf16.mxu0 0
  %2398 = vmatpush1.bf16.msra.mxu0 %v2241
  %2399 = vmatprep.subr.bf16.mxu0 0
  %2400 = vmatpush1.bf16.msra.mxu0 %v2242
  %2401 = vmatprep.subr.bf16.mxu0 0
  %2402 = vmatpush1.bf16.msra.mxu0 %v2243
  %2403 = vmatprep.subr.bf16.mxu0 0
  %2404 = vmatpush1.bf16.msra.mxu0 %v2244
  %2405 = vmatprep.mubr.bf16.mxu0 %v1782
  %2406 = vmatmul.mubr.bf16.gmra.mrb[0].mxu0 %v1781
  %v2407 = vpop.f32.mrb[0].mxu0
  %v2408 = vadd.f32 %v1939, %v2407
  %v2409 = vpop.f32.mrb[0].mxu0
  %v2410 = vpop.f32.mrb[0].mxu0
  %v2411 = vpop.f32.mrb[0].mxu0
  %2412 = vdwg.mxu0
  %2413 = vmatprep.subr.bf16.mxu0 0
  %2414 = vmatpush1.bf16.msra.mxu0 %v2245
  %2415 = vmatprep.subr.bf16.mxu0 0
  %2416 = vmatpush1.bf16.msra.mxu0 %v2246
  %2417 = vmatprep.subr.bf16.mxu0 0
  %2418 = vmatpush1.bf16.msra.mxu0 %v2247
  %2419 = vmatprep.subr.bf16.mxu0 0
  %2420 = vmatpush1.bf16.msra.mxu0 %v2248
  %2421 = vmatprep.subr.bf16.mxu0 0
  %2422 = vmatpush1.bf16.msra.mxu0 %v2249
  %2423 = vmatprep.subr.bf16.mxu0 0
  %2424 = vmatpush1.bf16.msra.mxu0 %v2250
  %2425 = vmatprep.subr.bf16.mxu0 0
  %2426 = vmatpush1.bf16.msra.mxu0 %v2251
  %2427 = vmatprep.subr.bf16.mxu0 0
  %2428 = vmatpush1.bf16.msra.mxu0 %v2252
  %2429 = vmatprep.subr.bf16.mxu0 0
  %2430 = vmatpush1.bf16.msra.mxu0 %v2253
  %2431 = vmatprep.subr.bf16.mxu0 0
  %2432 = vmatpush1.bf16.msra.mxu0 %v2254
  %2433 = vmatprep.subr.bf16.mxu0 0
  %2434 = vmatpush1.bf16.msra.mxu0 %v2255
  %2435 = vmatprep.subr.bf16.mxu0 0
  %2436 = vmatpush1.bf16.msra.mxu0 %v2256
  %2437 = vmatprep.subr.bf16.mxu0 0
  %2438 = vmatpush1.bf16.msra.mxu0 %v2257
  %2439 = vmatprep.subr.bf16.mxu0 0
  %2440 = vmatpush1.bf16.msra.mxu0 %v2258
  %2441 = vmatprep.subr.bf16.mxu0 0
  %2442 = vmatpush1.bf16.msra.mxu0 %v2259
  %2443 = vmatprep.subr.bf16.mxu0 0
  %2444 = vmatpush1.bf16.msra.mxu0 %v2260
  %2445 = vmatprep.mubr.bf16.mxu0 %v1784
  %2446 = vmatmul.mubr.bf16.gmra.mrb[0].mxu0 %v1783
  %v2447 = vpop.f32.mrb[0].mxu0
  %v2448 = vadd.f32 %v2408, %v2447
  %v2449 = vpop.f32.mrb[0].mxu0
  %v2450 = vpop.f32.mrb[0].mxu0
  %v2451 = vpop.f32.mrb[0].mxu0
  %2452 = vdwg.mxu0
  %2453 = vmatprep.subr.bf16.mxu0 0
  %2454 = vmatpush1.bf16.msra.mxu0 %v2261
  %2455 = vmatprep.subr.bf16.mxu0 0
  %2456 = vmatpush1.bf16.msra.mxu0 %v2262
  %2457 = vmatprep.subr.bf16.mxu0 0
  %2458 = vmatpush1.bf16.msra.mxu0 %v2263
  %2459 = vmatprep.subr.bf16.mxu0 0
  %2460 = vmatpush1.bf16.msra.mxu0 %v2264
  %2461 = vmatprep.subr.bf16.mxu0 0
  %2462 = vmatpush1.bf16.msra.mxu0 %v2265
  %2463 = vmatprep.subr.bf16.mxu0 0
  %2464 = vmatpush1.bf16.msra.mxu0 %v2266
  %2465 = vmatprep.subr.bf16.mxu0 0
  %2466 = vmatpush1.bf16.msra.mxu0 %v2267
  %2467 = vmatprep.subr.bf16.mxu0 0
  %2468 = vmatpush1.bf16.msra.mxu0 %v2268
  %2469 = vmatprep.subr.bf16.mxu0 0
  %2470 = vmatpush1.bf16.msra.mxu0 %v2269
  %2471 = vmatprep.subr.bf16.mxu0 0
  %2472 = vmatpush1.bf16.msra.mxu0 %v2270
  %2473 = vmatprep.subr.bf16.mxu0 0
  %2474 = vmatpush1.bf16.msra.mxu0 %v2271
  %2475 = vmatprep.subr.bf16.mxu0 0
  %2476 = vmatpush1.bf16.msra.mxu0 %v2272
  %2477 = vmatprep.subr.bf16.mxu0 0
  %2478 = vmatpush1.bf16.msra.mxu0 %v2273
  %2479 = vmatprep.subr.bf16.mxu0 0
  %2480 = vmatpush1.bf16.msra.mxu0 %v2274
  %2481 = vmatprep.subr.bf16.mxu0 0
  %2482 = vmatpush1.bf16.msra.mxu0 %v2275
  %2483 = vmatprep.subr.bf16.mxu0 0
  %2484 = vmatpush1.bf16.msra.mxu0 %v2276
  %2485 = vmatprep.mubr.bf16.mxu0 %v1786
  %2486 = vmatmul.mubr.bf16.gmra.mrb[0].mxu0 %v1785
  %v2487 = vpop.f32.mrb[0].mxu0
  %v2488 = vadd.f32 %v2448, %v2487
  %v2489 = vpop.f32.mrb[0].mxu0
  %v2490 = vpop.f32.mrb[0].mxu0
  %v2491 = vpop.f32.mrb[0].mxu0
  %2492 = vdwg.mxu0
  %2493 = vmatprep.subr.bf16.mxu0 0
  %2494 = vmatpush1.bf16.msra.mxu0 %v2277
  %2495 = vmatprep.subr.bf16.mxu0 0
  %2496 = vmatpush1.bf16.msra.mxu0 %v2278
  %2497 = vmatprep.subr.bf16.mxu0 0
  %2498 = vmatpush1.bf16.msra.mxu0 %v2279
  %2499 = vmatprep.subr.bf16.mxu0 0
  %2500 = vmatpush1.bf16.msra.mxu0 %v2280
  %2501 = vmatprep.subr.bf16.mxu0 0
  %2502 = vmatpush1.bf16.msra.mxu0 %v2281
  %2503 = vmatprep.subr.bf16.mxu0 0
  %2504 = vmatpush1.bf16.msra.mxu0 %v2282
  %2505 = vmatprep.subr.bf16.mxu0 0
  %2506 = vmatpush1.bf16.msra.mxu0 %v2283
  %2507 = vmatprep.subr.bf16.mxu0 0
  %2508 = vmatpush1.bf16.msra.mxu0 %v2284
  %2509 = vmatprep.subr.bf16.mxu0 0
  %2510 = vmatpush1.bf16.msra.mxu0 %v2285
  %2511 = vmatprep.subr.bf16.mxu0 0
  %2512 = vmatpush1.bf16.msra.mxu0 %v2286
  %2513 = vmatprep.subr.bf16.mxu0 0
  %2514 = vmatpush1.bf16.msra.mxu0 %v2287
  %2515 = vmatprep.subr.bf16.mxu0 0
  %2516 = vmatpush1.bf16.msra.mxu0 %v2288
  %2517 = vmatprep.subr.bf16.mxu0 0
  %2518 = vmatpush1.bf16.msra.mxu0 %v2289
  %2519 = vmatprep.subr.bf16.mxu0 0
  %2520 = vmatpush1.bf16.msra.mxu0 %v2290
  %2521 = vmatprep.subr.bf16.mxu0 0
  %2522 = vmatpush1.bf16.msra.mxu0 %v2291
  %2523 = vmatprep.subr.bf16.mxu0 0
  %2524 = vmatpush1.bf16.msra.mxu0 %v2292
  %2525 = vmatprep.mubr.bf16.mxu0 %v1788
  %2526 = vmatmul.mubr.bf16.gmra.mrb[0].mxu0 %v1787
  %v2527 = vpop.f32.mrb[0].mxu0
  %v2528 = vadd.f32 %v2488, %v2527
  %v2529 = vpop.f32.mrb[0].mxu0
  %v2530 = vpop.f32.mrb[0].mxu0
  %v2531 = vpop.f32.mrb[0].mxu0
  %2532 = vdwg.mxu0
  %2533 = vmatprep.subr.bf16.mxu0 0
  %2534 = vmatpush1.bf16.msra.mxu0 %v2293
  %2535 = vmatprep.subr.bf16.mxu0 0
  %2536 = vmatpush1.bf16.msra.mxu0 %v2294
  %2537 = vmatprep.subr.bf16.mxu0 0
  %2538 = vmatpush1.bf16.msra.mxu0 %v2295
  %2539 = vmatprep.subr.bf16.mxu0 0
  %2540 = vmatpush1.bf16.msra.mxu0 %v2296
  %2541 = vmatprep.subr.bf16.mxu0 0
  %2542 = vmatpush1.bf16.msra.mxu0 %v2297
  %2543 = vmatprep.subr.bf16.mxu0 0
  %2544 = vmatpush1.bf16.msra.mxu0 %v2298
  %2545 = vmatprep.subr.bf16.mxu0 0
  %2546 = vmatpush1.bf16.msra.mxu0 %v2299
  %2547 = vmatprep.subr.bf16.mxu0 0
  %2548 = vmatpush1.bf16.msra.mxu0 %v2300
  %2549 = vmatprep.subr.bf16.mxu0 0
  %2550 = vmatpush1.bf16.msra.mxu0 0
  %2551 = vmatprep.subr.bf16.mxu0 0
  %2552 = vmatpush1.bf16.msra.mxu0 0
  %2553 = vmatprep.subr.bf16.mxu0 0
  %2554 = vmatpush1.bf16.msra.mxu0 0
  %2555 = vmatprep.subr.bf16.mxu0 0
  %2556 = vmatpush1.bf16.msra.mxu0 0
  %2557 = vmatprep.subr.bf16.mxu0 0
  %2558 = vmatpush1.bf16.msra.mxu0 0
  %2559 = vmatprep.subr.bf16.mxu0 0
  %2560 = vmatpush1.bf16.msra.mxu0 0
  %2561 = vmatprep.subr.bf16.mxu0 0
  %2562 = vmatpush1.bf16.msra.mxu0 0
  %2563 = vmatprep.subr.bf16.mxu0 0
  %2564 = vmatpush1.bf16.msra.mxu0 0
  %2565 = vmatprep.mubr.bf16.mxu0 0
  %2566 = vmatmul.mubr.bf16.gmra.mrb[0].mxu0 %v1789
  %v2567 = vpop.f32.mrb[0].mxu0
  %v2568 = vadd.f32 %v2528, %v2567
  %v2569 = vpop.f32.mrb[0].mxu0
  %v2570 = vpop.f32.mrb[0].mxu0
  %v2571 = vpop.f32.mrb[0].mxu0
  %2572 = vdwg.mxu0
  %2573 = vst.msk [vmem:[%s7] sm:$0xff] %vm1180, %v2568
  // Predicated region
  $region30: #{encoder_forward.1} parent=0 // pred_check
    _
  $region31: #{encoder_forward.1} parent=0 // pred_check_branch
    %2575 = sbr.rel (0) target = $region33
  $region32: #{encoder_forward.1} parent=0 // pred_region
    _
  $region33: #{encoder_forward.1} parent=0 // pred_fallthru
    _
  // Predicated region
  $region34: #{encoder_forward.1} parent=0 // pred_check
    _
  $region35: #{encoder_forward.1} parent=0 // pred_check_branch
    %2577 = sbr.rel (0) target = $region37
  $region36: #{encoder_forward.1} parent=0 // pred_region
    _
  $region37: #{encoder_forward.1} parent=0 // pred_fallthru
    _

</llo_original>
